<compile_context>
chip_gen: v7x
topology: tpu7x:2x2x1
jax: 0.10.0
libtpu: 0.0.40
codegen_flags: <defaults>
</compile_context>

<pallas_src>
import jax
import jax.numpy as jnp
from jax import lax
from jax.experimental import pallas as pl
from jax.experimental.pallas import tpu as pltpu

# ---- problem sizes (small, consistent with the module's forward) ------------
B, CIN, H, W = 2, 4, 16, 16          # images: (B, CIN, H, W)  (NCHW like torch)
COUT = 8                             # backbone feature channels
VOCAB = 32                           # vocab_size
MAX_SEQ = 8                          # max_seq_length
KH = KW = 3
HW = H * W                           # 256
BHW = B * HW                         # 512 lanes (multiple of 128)
VPAD = 128                           # lane-dense padding for output slabs
NSUB = 8                             # sublane-dense padding for output slabs
GUARD = W + 1                        # max |oy*W + ox| for a 3x3 tap (=17)
_LOG2W = (W - 1).bit_length()        # H, W are powers of two (16 -> shift by 4)


# ------------------------- Pallas kernel --------------------------------------
def _img2words_kernel(x_ref, cw_ref, cb_ref, fw_ref, fb_ref, probs_ref, words_ref):
    """conv3x3(+bias,ReLU) -> GAP -> fc -> sigmoid -> words, whole batch fused."""
    # ---------------- conv3x3 (zero pad=1), in-kernel im2col -------------------
    xv = x_ref[...]                                        # (CIN, BHW + 2*GUARD)

    # Flat output position -> (row, col) within its image (powers-of-two sizes).
    t = lax.broadcasted_iota(jnp.int32, (CIN, BHW), 1)
    col = t & (W - 1)
    row = (t >> _LOG2W) & (H - 1)
    row_ok = {-1: row > 0, 0: None, 1: row < H - 1}
    col_ok = {-1: col > 0, 0: None, 1: col < W - 1}

    feat = None
    for dy in range(KH):
        for dx in range(KW):
            oy, ox = dy - 1, dx - 1
            off = GUARD + oy * W + ox                      # static lane offset
            tap = xv[:, off:off + BHW]                     # (CIN, BHW)
            valid = row_ok[oy]
            if col_ok[ox] is not None:
                valid = col_ok[ox] if valid is None else (valid & col_ok[ox])
            if valid is not None:                          # zero-pad boundary taps
                tap = jnp.where(valid, tap, 0.0)
            w_tap = cw_ref[dy * KW + dx]                   # (COUT, CIN)
            part = jnp.dot(w_tap, tap, preferred_element_type=jnp.float32)
            feat = part if feat is None else feat + part   # (COUT, BHW)
    feat = jnp.maximum(feat + cb_ref[...], 0.0)            # bias + ReLU

    # ---------------- GAP (XLU) + classifier (VPU) + sigmoid -------------------
    fw = fw_ref[...]                                       # (COUT, VPAD)
    fb = fb_ref[...]                                       # (1, VPAD)
    inv_hw = jnp.float32(1.0 / HW)
    rowid = lax.broadcasted_iota(jnp.int32, (NSUB, VPAD), 0)
    probs = jnp.zeros((NSUB, VPAD), jnp.float32)           # sublane-padded slab
    for b in range(B):
        # per-image mean pool: aligned 256-lane window, one lane reduction
        pooled = jnp.sum(feat[:, b * HW:(b + 1) * HW], axis=1, keepdims=True) * inv_hw
        # fc as broadcast-mul + sublane reduction (keeps the MXU chain short)
        logits = jnp.sum(pooled * fw, axis=0, keepdims=True) + fb   # (1, VPAD)
        probs = jnp.where(rowid == b, jax.nn.sigmoid(logits), probs)
    probs_ref[...] = probs                                 # full (8,128) store

    # ---------------- words_split: top-MAX_SEQ, one reduction per pick ---------
    lane = lax.broadcasted_iota(jnp.int32, (NSUB, VPAD), 1)
    # Packed key: prob's f32 bits with the low 5 mantissa bits replaced by
    # (VOCAB-1 - lane).  probs are positive, so comparing the packed key AS A
    # FLOAT preserves the (quantized prob, smaller-index-wins) order, and a
    # single f32 max per pick gives both the value's lane and its rank.
    pbits = pltpu.bitcast(probs, jnp.int32)                # bits >= 0 (probs in (0,1))
    ikey = (pbits & jnp.int32(-32)) | (jnp.int32(VOCAB - 1) - lane)
    fkey = pltpu.bitcast(ikey, jnp.float32)
    fkey = jnp.where(lane < VOCAB, fkey, -1.0)             # mask padded vocab lanes

    # Exact threshold: descending order => emit while (2*p).int() != 0 is
    # equivalent to emitting the first `n_keep` picks.
    n_keep = jnp.sum(
        jnp.where((lane < VOCAB) & ((probs * 2.0).astype(jnp.int32) != 0), 1.0, 0.0),
        axis=1, keepdims=True)                             # (NSUB, 1) f32 count

    words = jnp.full((NSUB, VPAD), 2, jnp.int32)           # pad token 2
    for j in range(MAX_SEQ):                               # static unroll (8)
        mkey = jnp.max(fkey, axis=1, keepdims=True)        # ONE lane reduction
        idx = jnp.int32(VOCAB - 1) - (pltpu.bitcast(mkey, jnp.int32)
                                      & jnp.int32(VOCAB - 1))
        wj = jnp.where(jnp.float32(j) < n_keep, idx, 2)
        words = jnp.where(lane == j, wj, words)
        fkey = jnp.where(lane == idx, -1.0, fkey)          # remove selected lane
    words_ref[...] = words                                 # full (8,128) store


# ------------------------- wrapper ---------------------------------------------
def img2words_forward(images, conv_w, conv_b, fc_w, fc_b):
    """Equivalent of Img2WordsCNN.forward: returns (mul_class, words)."""
    # Lane-major activation slab (CIN, B*H*W) with zero guard lanes so every
    # 3x3 tap is a static lane slice inside the kernel (im2col fused in-kernel).
    x_lane = jnp.transpose(images, (1, 0, 2, 3)).reshape(CIN, BHW)
    x_ext = jnp.pad(x_lane, ((0, 0), (GUARD, GUARD)))              # (CIN, BHW+34)
    cw = jnp.transpose(conv_w, (0, 1, 3, 2)).reshape(KH * KW, COUT, CIN)
    cb = conv_b.reshape(COUT, 1)
    fw = jnp.pad(fc_w, ((0, 0), (0, VPAD - VOCAB)))                # (COUT, VPAD)
    fb = jnp.pad(fc_b, ((0, 0), (0, VPAD - VOCAB)))                # (1, VPAD)

    # Whole working set < 100 KB -> single grid-less invocation; every operand
    # is a full-array VMEM-resident block, outputs are full (8,128) vreg slabs.
    probs_pad, words_pad = pl.pallas_call(
        _img2words_kernel,
        out_shape=(jax.ShapeDtypeStruct((NSUB, VPAD), jnp.float32),
                   jax.ShapeDtypeStruct((NSUB, VPAD), jnp.int32)),
    )(x_ext, cw, cb, fw, fb)

    mul_class = probs_pad[:B, :VOCAB]                              # (B, VOCAB)
    # TODO(synk): torch returns int64 words; int32 here (JAX x64 disabled).
    words = words_pad[:B, :MAX_SEQ]                                # (B, MAX_SEQ)
    return mul_class, words


# ------------------------- pure-JAX reference (validation only) ----------------
def _reference_mul_class(images, conv_w, conv_b, fc_w, fc_b):
    x = jnp.transpose(images, (0, 2, 3, 1))
    feat = lax.conv_general_dilated(x, conv_w, (1, 1), 'SAME',
                                    dimension_numbers=('NHWC', 'HWIO', 'NHWC'))
    feat = jnp.maximum(feat + conv_b.reshape(1, 1, 1, COUT), 0.0)
    pooled = jnp.mean(feat, axis=(1, 2))
    return jax.nn.sigmoid(pooled @ fc_w + fc_b)


def _reference_words(mul_class):
    # Faithful to words_split (descending sort, emit index while (2*p).int()!=0,
    # pad token 2 afterwards).  The sort key mirrors the kernel: prob bits with
    # the low 5 mantissa bits cleared, ties -> smaller index (torch.sort leaves
    # the order of such sub-1e-5 ties unspecified anyway).
    qkey = lax.bitcast_convert_type(mul_class, jnp.int32) & jnp.int32(-32)
    order = jnp.argsort(-qkey, axis=1)[:, :MAX_SEQ].astype(jnp.int32)  # stable
    keep = jnp.sum((mul_class * 2.0).astype(jnp.int32) != 0, axis=1, keepdims=True)
    pos = jnp.arange(MAX_SEQ, dtype=jnp.int32)[None, :]
    return jnp.where(pos < keep, order, 2)


# ------------------------- main -------------------------------------------------
if __name__ == "__main__":
    key = jax.random.PRNGKey(0)
    k1, k2, k3, k4, k5 = jax.random.split(key, 5)
    conv_w = 0.1 * jax.random.normal(k1, (KH, KW, CIN, COUT), jnp.float32)
    conv_b = 0.1 * jax.random.normal(k2, (1, COUT), jnp.float32)
    fc_w = 0.5 * jax.random.normal(k3, (COUT, VOCAB), jnp.float32)
    fc_b = 0.5 * jax.random.normal(k4, (1, VOCAB), jnp.float32)
    images = jax.random.normal(k5, (B, CIN, H, W), jnp.float32)    # NCHW like PyTorch

    mul_class, words = jax.jit(img2words_forward)(images, conv_w, conv_b, fc_w, fc_b)
    jax.block_until_ready((mul_class, words))

    assert mul_class.shape == (B, VOCAB) and words.shape == (B, MAX_SEQ)
    assert bool(jnp.all((mul_class > 0.0) & (mul_class < 1.0)))
    assert bool(jnp.all((words >= 0) & (words < VOCAB)))

    # Validate against a pure-JAX reference of the same synthesized forward.
    ref_cls = _reference_mul_class(images, conv_w, conv_b, fc_w, fc_b)
    assert bool(jnp.allclose(mul_class, ref_cls, atol=1e-4, rtol=1e-4))
    assert bool(jnp.all(words == _reference_words(mul_class)))

    print("KERNEL_OK")
</pallas_src>

<mosaic_0001>
module attributes {stable_mosaic.version = 11 : i64} {
  func.func @_img2words_kernel(%arg0: memref<4x546xf32, #tpu.memory_space<vmem>>, %arg1: memref<9x8x4xf32, #tpu.memory_space<vmem>>, %arg2: memref<8x1xf32, #tpu.memory_space<vmem>>, %arg3: memref<8x128xf32, #tpu.memory_space<vmem>>, %arg4: memref<1x128xf32, #tpu.memory_space<vmem>>, %arg5: memref<8x128xf32, #tpu.memory_space<vmem>>, %arg6: memref<8x128xi32, #tpu.memory_space<vmem>>) attributes {dimension_semantics = [], scalar_prefetch = 0 : i64, scratch_operands = 0 : i64, tpu.core_type = #tpu.core_type<tc>} {
    %c0 = arith.constant 0 : index
    %c0_0 = arith.constant 0 : index
    %0 = vector.load %arg0[%c0, %c0_0] : memref<4x546xf32, #tpu.memory_space<vmem>>, vector<4x546xf32>
    %1 = tpu.iota {dimensions = array<i32: 1>} : vector<4x512xi32>
    %c15_i32 = arith.constant 15 : i32
    %2 = vector.broadcast %c15_i32 : i32 to vector<4x512xi32>
    %3 = arith.andi %1, %2 : vector<4x512xi32>
    %c4_i32 = arith.constant 4 : i32
    %4 = vector.broadcast %c4_i32 : i32 to vector<4x512xi32>
    %5 = arith.shrsi %1, %4 : vector<4x512xi32>
    %c15_i32_1 = arith.constant 15 : i32
    %6 = vector.broadcast %c15_i32_1 : i32 to vector<4x512xi32>
    %7 = arith.andi %5, %6 : vector<4x512xi32>
    %c0_i32 = arith.constant 0 : i32
    %8 = vector.broadcast %c0_i32 : i32 to vector<4x512xi32>
    %9 = arith.cmpi sgt, %7, %8 : vector<4x512xi32>
    %c15_i32_2 = arith.constant 15 : i32
    %10 = vector.broadcast %c15_i32_2 : i32 to vector<4x512xi32>
    %11 = arith.cmpi slt, %7, %10 : vector<4x512xi32>
    %c0_i32_3 = arith.constant 0 : i32
    %12 = vector.broadcast %c0_i32_3 : i32 to vector<4x512xi32>
    %13 = arith.cmpi sgt, %3, %12 : vector<4x512xi32>
    %c15_i32_4 = arith.constant 15 : i32
    %14 = vector.broadcast %c15_i32_4 : i32 to vector<4x512xi32>
    %15 = arith.cmpi slt, %3, %14 : vector<4x512xi32>
    %16 = vector.extract_strided_slice %0 {offsets = [0, 0], sizes = [4, 512], strides = [1, 1]} : vector<4x546xf32> to vector<4x512xf32>
    %17 = arith.andi %9, %13 : vector<4x512xi1>
    %cst = arith.constant 0.000000e+00 : f32
    %18 = vector.broadcast %cst : f32 to vector<4x512xf32>
    %19 = arith.select %17, %16, %18 : vector<4x512xi1>, vector<4x512xf32>
    %c0_5 = arith.constant 0 : index
    %c0_6 = arith.constant 0 : index
    %c0_7 = arith.constant 0 : index
    %20 = vector.load %arg1[%c0_5, %c0_6, %c0_7] : memref<9x8x4xf32, #tpu.memory_space<vmem>>, vector<1x8x4xf32>
    %21 = vector.shape_cast %20 : vector<1x8x4xf32> to vector<8x4xf32>
    %cst_8 = arith.constant dense<0.000000e+00> : vector<8x512xf32>
    %22 = tpu.matmul %21, %19, %cst_8 {dimension_numbers = #tpu.dot_dimension_numbers<[1], [0], [0], [1], [0, 0, 1, 1], [], []>} : vector<8x4xf32>, vector<4x512xf32>, vector<8x512xf32> -> vector<8x512xf32>
    %23 = vector.extract_strided_slice %0 {offsets = [0, 1], sizes = [4, 512], strides = [1, 1]} : vector<4x546xf32> to vector<4x512xf32>
    %cst_9 = arith.constant 0.000000e+00 : f32
    %24 = vector.broadcast %cst_9 : f32 to vector<4x512xf32>
    %25 = arith.select %9, %23, %24 : vector<4x512xi1>, vector<4x512xf32>
    %c1 = arith.constant 1 : index
    %c0_10 = arith.constant 0 : index
    %c0_11 = arith.constant 0 : index
    %26 = vector.load %arg1[%c1, %c0_10, %c0_11] : memref<9x8x4xf32, #tpu.memory_space<vmem>>, vector<1x8x4xf32>
    %27 = vector.shape_cast %26 : vector<1x8x4xf32> to vector<8x4xf32>
    %cst_12 = arith.constant dense<0.000000e+00> : vector<8x512xf32>
    %28 = tpu.matmul %27, %25, %cst_12 {dimension_numbers = #tpu.dot_dimension_numbers<[1], [0], [0], [1], [0, 0, 1, 1], [], []>} : vector<8x4xf32>, vector<4x512xf32>, vector<8x512xf32> -> vector<8x512xf32>
    %29 = arith.addf %22, %28 : vector<8x512xf32>
    %30 = vector.extract_strided_slice %0 {offsets = [0, 2], sizes = [4, 512], strides = [1, 1]} : vector<4x546xf32> to vector<4x512xf32>
    %31 = arith.andi %9, %15 : vector<4x512xi1>
    %cst_13 = arith.constant 0.000000e+00 : f32
    %32 = vector.broadcast %cst_13 : f32 to vector<4x512xf32>
    %33 = arith.select %31, %30, %32 : vector<4x512xi1>, vector<4x512xf32>
    %c2 = arith.constant 2 : index
    %c0_14 = arith.constant 0 : index
    %c0_15 = arith.constant 0 : index
    %34 = vector.load %arg1[%c2, %c0_14, %c0_15] : memref<9x8x4xf32, #tpu.memory_space<vmem>>, vector<1x8x4xf32>
    %35 = vector.shape_cast %34 : vector<1x8x4xf32> to vector<8x4xf32>
    %cst_16 = arith.constant dense<0.000000e+00> : vector<8x512xf32>
    %36 = tpu.matmul %35, %33, %cst_16 {dimension_numbers = #tpu.dot_dimension_numbers<[1], [0], [0], [1], [0, 0, 1, 1], [], []>} : vector<8x4xf32>, vector<4x512xf32>, vector<8x512xf32> -> vector<8x512xf32>
    %37 = arith.addf %29, %36 : vector<8x512xf32>
    %38 = vector.extract_strided_slice %0 {offsets = [0, 16], sizes = [4, 512], strides = [1, 1]} : vector<4x546xf32> to vector<4x512xf32>
    %cst_17 = arith.constant 0.000000e+00 : f32
    %39 = vector.broadcast %cst_17 : f32 to vector<4x512xf32>
    %40 = arith.select %13, %38, %39 : vector<4x512xi1>, vector<4x512xf32>
    %c3 = arith.constant 3 : index
    %c0_18 = arith.constant 0 : index
    %c0_19 = arith.constant 0 : index
    %41 = vector.load %arg1[%c3, %c0_18, %c0_19] : memref<9x8x4xf32, #tpu.memory_space<vmem>>, vector<1x8x4xf32>
    %42 = vector.shape_cast %41 : vector<1x8x4xf32> to vector<8x4xf32>
    %cst_20 = arith.constant dense<0.000000e+00> : vector<8x512xf32>
    %43 = tpu.matmul %42, %40, %cst_20 {dimension_numbers = #tpu.dot_dimension_numbers<[1], [0], [0], [1], [0, 0, 1, 1], [], []>} : vector<8x4xf32>, vector<4x512xf32>, vector<8x512xf32> -> vector<8x512xf32>
    %44 = arith.addf %37, %43 : vector<8x512xf32>
    %45 = vector.extract_strided_slice %0 {offsets = [0, 17], sizes = [4, 512], strides = [1, 1]} : vector<4x546xf32> to vector<4x512xf32>
    %c4 = arith.constant 4 : index
    %c0_21 = arith.constant 0 : index
    %c0_22 = arith.constant 0 : index
    %46 = vector.load %arg1[%c4, %c0_21, %c0_22] : memref<9x8x4xf32, #tpu.memory_space<vmem>>, vector<1x8x4xf32>
    %47 = vector.shape_cast %46 : vector<1x8x4xf32> to vector<8x4xf32>
    %cst_23 = arith.constant dense<0.000000e+00> : vector<8x512xf32>
    %48 = tpu.matmul %47, %45, %cst_23 {dimension_numbers = #tpu.dot_dimension_numbers<[1], [0], [0], [1], [0, 0, 1, 1], [], []>} : vector<8x4xf32>, vector<4x512xf32>, vector<8x512xf32> -> vector<8x512xf32>
    %49 = arith.addf %44, %48 : vector<8x512xf32>
    %50 = vector.extract_strided_slice %0 {offsets = [0, 18], sizes = [4, 512], strides = [1, 1]} : vector<4x546xf32> to vector<4x512xf32>
    %cst_24 = arith.constant 0.000000e+00 : f32
    %51 = vector.broadcast %cst_24 : f32 to vector<4x512xf32>
    %52 = arith.select %15, %50, %51 : vector<4x512xi1>, vector<4x512xf32>
    %c5 = arith.constant 5 : index
    %c0_25 = arith.constant 0 : index
    %c0_26 = arith.constant 0 : index
    %53 = vector.load %arg1[%c5, %c0_25, %c0_26] : memref<9x8x4xf32, #tpu.memory_space<vmem>>, vector<1x8x4xf32>
    %54 = vector.shape_cast %53 : vector<1x8x4xf32> to vector<8x4xf32>
    %cst_27 = arith.constant dense<0.000000e+00> : vector<8x512xf32>
    %55 = tpu.matmul %54, %52, %cst_27 {dimension_numbers = #tpu.dot_dimension_numbers<[1], [0], [0], [1], [0, 0, 1, 1], [], []>} : vector<8x4xf32>, vector<4x512xf32>, vector<8x512xf32> -> vector<8x512xf32>
    %56 = arith.addf %49, %55 : vector<8x512xf32>
    %57 = vector.extract_strided_slice %0 {offsets = [0, 32], sizes = [4, 512], strides = [1, 1]} : vector<4x546xf32> to vector<4x512xf32>
    %58 = arith.andi %11, %13 : vector<4x512xi1>
    %cst_28 = arith.constant 0.000000e+00 : f32
    %59 = vector.broadcast %cst_28 : f32 to vector<4x512xf32>
    %60 = arith.select %58, %57, %59 : vector<4x512xi1>, vector<4x512xf32>
    %c6 = arith.constant 6 : index
    %c0_29 = arith.constant 0 : index
    %c0_30 = arith.constant 0 : index
    %61 = vector.load %arg1[%c6, %c0_29, %c0_30] : memref<9x8x4xf32, #tpu.memory_space<vmem>>, vector<1x8x4xf32>
    %62 = vector.shape_cast %61 : vector<1x8x4xf32> to vector<8x4xf32>
    %cst_31 = arith.constant dense<0.000000e+00> : vector<8x512xf32>
    %63 = tpu.matmul %62, %60, %cst_31 {dimension_numbers = #tpu.dot_dimension_numbers<[1], [0], [0], [1], [0, 0, 1, 1], [], []>} : vector<8x4xf32>, vector<4x512xf32>, vector<8x512xf32> -> vector<8x512xf32>
    %64 = arith.addf %56, %63 : vector<8x512xf32>
    %65 = vector.extract_strided_slice %0 {offsets = [0, 33], sizes = [4, 512], strides = [1, 1]} : vector<4x546xf32> to vector<4x512xf32>
    %cst_32 = arith.constant 0.000000e+00 : f32
    %66 = vector.broadcast %cst_32 : f32 to vector<4x512xf32>
    %67 = arith.select %11, %65, %66 : vector<4x512xi1>, vector<4x512xf32>
    %c7 = arith.constant 7 : index
    %c0_33 = arith.constant 0 : index
    %c0_34 = arith.constant 0 : index
    %68 = vector.load %arg1[%c7, %c0_33, %c0_34] : memref<9x8x4xf32, #tpu.memory_space<vmem>>, vector<1x8x4xf32>
    %69 = vector.shape_cast %68 : vector<1x8x4xf32> to vector<8x4xf32>
    %cst_35 = arith.constant dense<0.000000e+00> : vector<8x512xf32>
    %70 = tpu.matmul %69, %67, %cst_35 {dimension_numbers = #tpu.dot_dimension_numbers<[1], [0], [0], [1], [0, 0, 1, 1], [], []>} : vector<8x4xf32>, vector<4x512xf32>, vector<8x512xf32> -> vector<8x512xf32>
    %71 = arith.addf %64, %70 : vector<8x512xf32>
    %72 = vector.extract_strided_slice %0 {offsets = [0, 34], sizes = [4, 512], strides = [1, 1]} : vector<4x546xf32> to vector<4x512xf32>
    %73 = arith.andi %11, %15 : vector<4x512xi1>
    %cst_36 = arith.constant 0.000000e+00 : f32
    %74 = vector.broadcast %cst_36 : f32 to vector<4x512xf32>
    %75 = arith.select %73, %72, %74 : vector<4x512xi1>, vector<4x512xf32>
    %c8 = arith.constant 8 : index
    %c0_37 = arith.constant 0 : index
    %c0_38 = arith.constant 0 : index
    %76 = vector.load %arg1[%c8, %c0_37, %c0_38] : memref<9x8x4xf32, #tpu.memory_space<vmem>>, vector<1x8x4xf32>
    %77 = vector.shape_cast %76 : vector<1x8x4xf32> to vector<8x4xf32>
    %cst_39 = arith.constant dense<0.000000e+00> : vector<8x512xf32>
    %78 = tpu.matmul %77, %75, %cst_39 {dimension_numbers = #tpu.dot_dimension_numbers<[1], [0], [0], [1], [0, 0, 1, 1], [], []>} : vector<8x4xf32>, vector<4x512xf32>, vector<8x512xf32> -> vector<8x512xf32>
    %79 = arith.addf %71, %78 : vector<8x512xf32>
    %c0_40 = arith.constant 0 : index
    %c0_41 = arith.constant 0 : index
    %80 = vector.load %arg2[%c0_40, %c0_41] : memref<8x1xf32, #tpu.memory_space<vmem>>, vector<8x1xf32>
    %81 = vector.broadcast %80 : vector<8x1xf32> to vector<8x512xf32>
    %82 = arith.addf %79, %81 : vector<8x512xf32>
    %cst_42 = arith.constant 0.000000e+00 : f32
    %83 = vector.broadcast %cst_42 : f32 to vector<8x512xf32>
    %84 = arith.maximumf %82, %83 : vector<8x512xf32>
    %c0_43 = arith.constant 0 : index
    %c0_44 = arith.constant 0 : index
    %85 = vector.load %arg3[%c0_43, %c0_44] : memref<8x128xf32, #tpu.memory_space<vmem>>, vector<8x128xf32>
    %c0_45 = arith.constant 0 : index
    %c0_46 = arith.constant 0 : index
    %86 = vector.load %arg4[%c0_45, %c0_46] : memref<1x128xf32, #tpu.memory_space<vmem>>, vector<1x128xf32>
    %87 = tpu.iota {dimensions = array<i32: 0>} : vector<8x128xi32>
    %cst_47 = arith.constant 0.000000e+00 : f32
    %88 = vector.broadcast %cst_47 : f32 to vector<8x128xf32>
    %89 = vector.extract_strided_slice %84 {offsets = [0, 0], sizes = [8, 256], strides = [1, 1]} : vector<8x512xf32> to vector<8x256xf32>
    %cst_48 = arith.constant dense<0.000000e+00> : vector<8xf32>
    %90 = vector.multi_reduction <add>, %89, %cst_48 [1] : vector<8x256xf32> to vector<8xf32>
    %91 = vector.shape_cast %90 : vector<8xf32> to vector<8x1xf32>
    %cst_49 = arith.constant 3.906250e-03 : f32
    %92 = vector.broadcast %cst_49 : f32 to vector<8x1xf32>
    %93 = arith.mulf %91, %92 : vector<8x1xf32>
    %94 = vector.broadcast %93 : vector<8x1xf32> to vector<8x128xf32>
    %95 = arith.mulf %94, %85 : vector<8x128xf32>
    %cst_50 = arith.constant dense<0.000000e+00> : vector<128xf32>
    %96 = vector.multi_reduction <add>, %95, %cst_50 [0] : vector<8x128xf32> to vector<128xf32>
    %97 = vector.shape_cast %96 : vector<128xf32> to vector<1x128xf32>
    %98 = arith.addf %97, %86 : vector<1x128xf32>
    %c0_i32_51 = arith.constant 0 : i32
    %99 = vector.broadcast %c0_i32_51 : i32 to vector<8x128xi32>
    %100 = arith.cmpi eq, %87, %99 : vector<8x128xi32>
    %101 = arith.negf %98 : vector<1x128xf32>
    %102 = math.exp %101 : vector<1x128xf32>
    %cst_52 = arith.constant 1.000000e+00 : f32
    %103 = vector.broadcast %cst_52 : f32 to vector<1x128xf32>
    %104 = arith.addf %103, %102 : vector<1x128xf32>
    %105 = arith.divf %103, %104 : vector<1x128xf32>
    %106 = vector.shape_cast %105 : vector<1x128xf32> to vector<1x128xf32>
    %107 = vector.broadcast %106 : vector<1x128xf32> to vector<8x128xf32>
    %108 = arith.select %100, %107, %88 : vector<8x128xi1>, vector<8x128xf32>
    %109 = vector.extract_strided_slice %84 {offsets = [0, 256], sizes = [8, 256], strides = [1, 1]} : vector<8x512xf32> to vector<8x256xf32>
    %cst_53 = arith.constant dense<0.000000e+00> : vector<8xf32>
    %110 = vector.multi_reduction <add>, %109, %cst_53 [1] : vector<8x256xf32> to vector<8xf32>
    %111 = vector.shape_cast %110 : vector<8xf32> to vector<8x1xf32>
    %cst_54 = arith.constant 3.906250e-03 : f32
    %112 = vector.broadcast %cst_54 : f32 to vector<8x1xf32>
    %113 = arith.mulf %111, %112 : vector<8x1xf32>
    %114 = vector.broadcast %113 : vector<8x1xf32> to vector<8x128xf32>
    %115 = arith.mulf %114, %85 : vector<8x128xf32>
    %cst_55 = arith.constant dense<0.000000e+00> : vector<128xf32>
    %116 = vector.multi_reduction <add>, %115, %cst_55 [0] : vector<8x128xf32> to vector<128xf32>
    %117 = vector.shape_cast %116 : vector<128xf32> to vector<1x128xf32>
    %118 = arith.addf %117, %86 : vector<1x128xf32>
    %c1_i32 = arith.constant 1 : i32
    %119 = vector.broadcast %c1_i32 : i32 to vector<8x128xi32>
    %120 = arith.cmpi eq, %87, %119 : vector<8x128xi32>
    %121 = arith.negf %118 : vector<1x128xf32>
    %122 = math.exp %121 : vector<1x128xf32>
    %cst_56 = arith.constant 1.000000e+00 : f32
    %123 = vector.broadcast %cst_56 : f32 to vector<1x128xf32>
    %124 = arith.addf %123, %122 : vector<1x128xf32>
    %125 = arith.divf %123, %124 : vector<1x128xf32>
    %126 = vector.shape_cast %125 : vector<1x128xf32> to vector<1x128xf32>
    %127 = vector.broadcast %126 : vector<1x128xf32> to vector<8x128xf32>
    %128 = arith.select %120, %127, %108 : vector<8x128xi1>, vector<8x128xf32>
    %c0_57 = arith.constant 0 : index
    %c0_58 = arith.constant 0 : index
    %129 = vector.load %arg5[%c0_57, %c0_58] : memref<8x128xf32, #tpu.memory_space<vmem>>, vector<8x128xf32>
    tpu.vector_store %arg5[%c0_57, %c0_58], %128 {strides = array<i32>} : memref<8x128xf32, #tpu.memory_space<vmem>>, vector<8x128xf32>,
    %130 = tpu.iota {dimensions = array<i32: 1>} : vector<8x128xi32>
    %131 = tpu.bitcast %128 : vector<8x128xf32> -> vector<8x128xi32>
    %c-32_i32 = arith.constant -32 : i32
    %132 = vector.broadcast %c-32_i32 : i32 to vector<8x128xi32>
    %133 = arith.andi %131, %132 : vector<8x128xi32>
    %c31_i32 = arith.constant 31 : i32
    %134 = vector.broadcast %c31_i32 : i32 to vector<8x128xi32>
    %135 = arith.subi %134, %130 : vector<8x128xi32>
    %136 = arith.ori %133, %135 : vector<8x128xi32>
    %137 = tpu.bitcast %136 : vector<8x128xi32> -> vector<8x128xf32>
    %c32_i32 = arith.constant 32 : i32
    %138 = vector.broadcast %c32_i32 : i32 to vector<8x128xi32>
    %139 = arith.cmpi slt, %130, %138 : vector<8x128xi32>
    %cst_59 = arith.constant -1.000000e+00 : f32
    %140 = vector.broadcast %cst_59 : f32 to vector<8x128xf32>
    %141 = arith.select %139, %137, %140 : vector<8x128xi1>, vector<8x128xf32>
    %c32_i32_60 = arith.constant 32 : i32
    %142 = vector.broadcast %c32_i32_60 : i32 to vector<8x128xi32>
    %143 = arith.cmpi slt, %130, %142 : vector<8x128xi32>
    %cst_61 = arith.constant 2.000000e+00 : f32
    %144 = vector.broadcast %cst_61 : f32 to vector<8x128xf32>
    %145 = arith.mulf %128, %144 : vector<8x128xf32>
    %146 = arith.fptosi %145 : vector<8x128xf32> to vector<8x128xi32>
    %c0_i32_62 = arith.constant 0 : i32
    %147 = vector.broadcast %c0_i32_62 : i32 to vector<8x128xi32>
    %148 = arith.cmpi ne, %146, %147 : vector<8x128xi32>
    %149 = arith.andi %143, %148 : vector<8x128xi1>
    %cst_63 = arith.constant 1.000000e+00 : f32
    %cst_64 = arith.constant 0.000000e+00 : f32
    %150 = vector.broadcast %cst_63 : f32 to vector<8x128xf32>
    %151 = vector.broadcast %cst_64 : f32 to vector<8x128xf32>
    %152 = arith.select %149, %150, %151 : vector<8x128xi1>, vector<8x128xf32>
    %cst_65 = arith.constant dense<0.000000e+00> : vector<8xf32>
    %153 = vector.multi_reduction <add>, %152, %cst_65 [1] : vector<8x128xf32> to vector<8xf32>
    %154 = vector.shape_cast %153 : vector<8xf32> to vector<8x1xf32>
    %c2_i32 = arith.constant 2 : i32
    %155 = vector.broadcast %c2_i32 : i32 to vector<8x128xi32>
    %cst_66 = arith.constant dense<0xFF800000> : vector<8xf32>
    %156 = vector.multi_reduction <maximumf>, %141, %cst_66 [1] : vector<8x128xf32> to vector<8xf32>
    %157 = vector.shape_cast %156 : vector<8xf32> to vector<8x1xf32>
    %158 = tpu.bitcast %157 : vector<8x1xf32> -> vector<8x1xi32>
    %c31_i32_67 = arith.constant 31 : i32
    %159 = vector.broadcast %c31_i32_67 : i32 to vector<8x1xi32>
    %160 = arith.andi %158, %159 : vector<8x1xi32>
    %c31_i32_68 = arith.constant 31 : i32
    %161 = vector.broadcast %c31_i32_68 : i32 to vector<8x1xi32>
    %162 = arith.subi %161, %160 : vector<8x1xi32>
    %cst_69 = arith.constant 0.000000e+00 : f32
    %163 = vector.broadcast %cst_69 : f32 to vector<8x1xf32>
    %164 = arith.cmpf olt, %163, %154 : vector<8x1xf32>
    %c2_i32_70 = arith.constant 2 : i32
    %165 = vector.broadcast %c2_i32_70 : i32 to vector<8x1xi32>
    %166 = arith.select %164, %162, %165 : vector<8x1xi1>, vector<8x1xi32>
    %c0_i32_71 = arith.constant 0 : i32
    %167 = vector.broadcast %c0_i32_71 : i32 to vector<8x128xi32>
    %168 = arith.cmpi eq, %130, %167 : vector<8x128xi32>
    %169 = vector.shape_cast %166 : vector<8x1xi32> to vector<8x1xi32>
    %170 = vector.broadcast %169 : vector<8x1xi32> to vector<8x128xi32>
    %171 = arith.select %168, %170, %155 : vector<8x128xi1>, vector<8x128xi32>
    %172 = vector.broadcast %162 : vector<8x1xi32> to vector<8x128xi32>
    %173 = arith.cmpi eq, %130, %172 : vector<8x128xi32>
    %cst_72 = arith.constant -1.000000e+00 : f32
    %174 = vector.broadcast %cst_72 : f32 to vector<8x128xf32>
    %175 = arith.select %173, %174, %141 : vector<8x128xi1>, vector<8x128xf32>
    %cst_73 = arith.constant dense<0xFF800000> : vector<8xf32>
    %176 = vector.multi_reduction <maximumf>, %175, %cst_73 [1] : vector<8x128xf32> to vector<8xf32>
    %177 = vector.shape_cast %176 : vector<8xf32> to vector<8x1xf32>
    %178 = tpu.bitcast %177 : vector<8x1xf32> -> vector<8x1xi32>
    %c31_i32_74 = arith.constant 31 : i32
    %179 = vector.broadcast %c31_i32_74 : i32 to vector<8x1xi32>
    %180 = arith.andi %178, %179 : vector<8x1xi32>
    %c31_i32_75 = arith.constant 31 : i32
    %181 = vector.broadcast %c31_i32_75 : i32 to vector<8x1xi32>
    %182 = arith.subi %181, %180 : vector<8x1xi32>
    %cst_76 = arith.constant 1.000000e+00 : f32
    %183 = vector.broadcast %cst_76 : f32 to vector<8x1xf32>
    %184 = arith.cmpf olt, %183, %154 : vector<8x1xf32>
    %c2_i32_77 = arith.constant 2 : i32
    %185 = vector.broadcast %c2_i32_77 : i32 to vector<8x1xi32>
    %186 = arith.select %184, %182, %185 : vector<8x1xi1>, vector<8x1xi32>
    %c1_i32_78 = arith.constant 1 : i32
    %187 = vector.broadcast %c1_i32_78 : i32 to vector<8x128xi32>
    %188 = arith.cmpi eq, %130, %187 : vector<8x128xi32>
    %189 = vector.shape_cast %186 : vector<8x1xi32> to vector<8x1xi32>
    %190 = vector.broadcast %189 : vector<8x1xi32> to vector<8x128xi32>
    %191 = arith.select %188, %190, %171 : vector<8x128xi1>, vector<8x128xi32>
    %192 = vector.broadcast %182 : vector<8x1xi32> to vector<8x128xi32>
    %193 = arith.cmpi eq, %130, %192 : vector<8x128xi32>
    %cst_79 = arith.constant -1.000000e+00 : f32
    %194 = vector.broadcast %cst_79 : f32 to vector<8x128xf32>
    %195 = arith.select %193, %194, %175 : vector<8x128xi1>, vector<8x128xf32>
    %cst_80 = arith.constant dense<0xFF800000> : vector<8xf32>
    %196 = vector.multi_reduction <maximumf>, %195, %cst_80 [1] : vector<8x128xf32> to vector<8xf32>
    %197 = vector.shape_cast %196 : vector<8xf32> to vector<8x1xf32>
    %198 = tpu.bitcast %197 : vector<8x1xf32> -> vector<8x1xi32>
    %c31_i32_81 = arith.constant 31 : i32
    %199 = vector.broadcast %c31_i32_81 : i32 to vector<8x1xi32>
    %200 = arith.andi %198, %199 : vector<8x1xi32>
    %c31_i32_82 = arith.constant 31 : i32
    %201 = vector.broadcast %c31_i32_82 : i32 to vector<8x1xi32>
    %202 = arith.subi %201, %200 : vector<8x1xi32>
    %cst_83 = arith.constant 2.000000e+00 : f32
    %203 = vector.broadcast %cst_83 : f32 to vector<8x1xf32>
    %204 = arith.cmpf olt, %203, %154 : vector<8x1xf32>
    %c2_i32_84 = arith.constant 2 : i32
    %205 = vector.broadcast %c2_i32_84 : i32 to vector<8x1xi32>
    %206 = arith.select %204, %202, %205 : vector<8x1xi1>, vector<8x1xi32>
    %c2_i32_85 = arith.constant 2 : i32
    %207 = vector.broadcast %c2_i32_85 : i32 to vector<8x128xi32>
    %208 = arith.cmpi eq, %130, %207 : vector<8x128xi32>
    %209 = vector.shape_cast %206 : vector<8x1xi32> to vector<8x1xi32>
    %210 = vector.broadcast %209 : vector<8x1xi32> to vector<8x128xi32>
    %211 = arith.select %208, %210, %191 : vector<8x128xi1>, vector<8x128xi32>
    %212 = vector.broadcast %202 : vector<8x1xi32> to vector<8x128xi32>
    %213 = arith.cmpi eq, %130, %212 : vector<8x128xi32>
    %cst_86 = arith.constant -1.000000e+00 : f32
    %214 = vector.broadcast %cst_86 : f32 to vector<8x128xf32>
    %215 = arith.select %213, %214, %195 : vector<8x128xi1>, vector<8x128xf32>
    %cst_87 = arith.constant dense<0xFF800000> : vector<8xf32>
    %216 = vector.multi_reduction <maximumf>, %215, %cst_87 [1] : vector<8x128xf32> to vector<8xf32>
    %217 = vector.shape_cast %216 : vector<8xf32> to vector<8x1xf32>
    %218 = tpu.bitcast %217 : vector<8x1xf32> -> vector<8x1xi32>
    %c31_i32_88 = arith.constant 31 : i32
    %219 = vector.broadcast %c31_i32_88 : i32 to vector<8x1xi32>
    %220 = arith.andi %218, %219 : vector<8x1xi32>
    %c31_i32_89 = arith.constant 31 : i32
    %221 = vector.broadcast %c31_i32_89 : i32 to vector<8x1xi32>
    %222 = arith.subi %221, %220 : vector<8x1xi32>
    %cst_90 = arith.constant 3.000000e+00 : f32
    %223 = vector.broadcast %cst_90 : f32 to vector<8x1xf32>
    %224 = arith.cmpf olt, %223, %154 : vector<8x1xf32>
    %c2_i32_91 = arith.constant 2 : i32
    %225 = vector.broadcast %c2_i32_91 : i32 to vector<8x1xi32>
    %226 = arith.select %224, %222, %225 : vector<8x1xi1>, vector<8x1xi32>
    %c3_i32 = arith.constant 3 : i32
    %227 = vector.broadcast %c3_i32 : i32 to vector<8x128xi32>
    %228 = arith.cmpi eq, %130, %227 : vector<8x128xi32>
    %229 = vector.shape_cast %226 : vector<8x1xi32> to vector<8x1xi32>
    %230 = vector.broadcast %229 : vector<8x1xi32> to vector<8x128xi32>
    %231 = arith.select %228, %230, %211 : vector<8x128xi1>, vector<8x128xi32>
    %232 = vector.broadcast %222 : vector<8x1xi32> to vector<8x128xi32>
    %233 = arith.cmpi eq, %130, %232 : vector<8x128xi32>
    %cst_92 = arith.constant -1.000000e+00 : f32
    %234 = vector.broadcast %cst_92 : f32 to vector<8x128xf32>
    %235 = arith.select %233, %234, %215 : vector<8x128xi1>, vector<8x128xf32>
    %cst_93 = arith.constant dense<0xFF800000> : vector<8xf32>
    %236 = vector.multi_reduction <maximumf>, %235, %cst_93 [1] : vector<8x128xf32> to vector<8xf32>
    %237 = vector.shape_cast %236 : vector<8xf32> to vector<8x1xf32>
    %238 = tpu.bitcast %237 : vector<8x1xf32> -> vector<8x1xi32>
    %c31_i32_94 = arith.constant 31 : i32
    %239 = vector.broadcast %c31_i32_94 : i32 to vector<8x1xi32>
    %240 = arith.andi %238, %239 : vector<8x1xi32>
    %c31_i32_95 = arith.constant 31 : i32
    %241 = vector.broadcast %c31_i32_95 : i32 to vector<8x1xi32>
    %242 = arith.subi %241, %240 : vector<8x1xi32>
    %cst_96 = arith.constant 4.000000e+00 : f32
    %243 = vector.broadcast %cst_96 : f32 to vector<8x1xf32>
    %244 = arith.cmpf olt, %243, %154 : vector<8x1xf32>
    %c2_i32_97 = arith.constant 2 : i32
    %245 = vector.broadcast %c2_i32_97 : i32 to vector<8x1xi32>
    %246 = arith.select %244, %242, %245 : vector<8x1xi1>, vector<8x1xi32>
    %c4_i32_98 = arith.constant 4 : i32
    %247 = vector.broadcast %c4_i32_98 : i32 to vector<8x128xi32>
    %248 = arith.cmpi eq, %130, %247 : vector<8x128xi32>
    %249 = vector.shape_cast %246 : vector<8x1xi32> to vector<8x1xi32>
    %250 = vector.broadcast %249 : vector<8x1xi32> to vector<8x128xi32>
    %251 = arith.select %248, %250, %231 : vector<8x128xi1>, vector<8x128xi32>
    %252 = vector.broadcast %242 : vector<8x1xi32> to vector<8x128xi32>
    %253 = arith.cmpi eq, %130, %252 : vector<8x128xi32>
    %cst_99 = arith.constant -1.000000e+00 : f32
    %254 = vector.broadcast %cst_99 : f32 to vector<8x128xf32>
    %255 = arith.select %253, %254, %235 : vector<8x128xi1>, vector<8x128xf32>
    %cst_100 = arith.constant dense<0xFF800000> : vector<8xf32>
    %256 = vector.multi_reduction <maximumf>, %255, %cst_100 [1] : vector<8x128xf32> to vector<8xf32>
    %257 = vector.shape_cast %256 : vector<8xf32> to vector<8x1xf32>
    %258 = tpu.bitcast %257 : vector<8x1xf32> -> vector<8x1xi32>
    %c31_i32_101 = arith.constant 31 : i32
    %259 = vector.broadcast %c31_i32_101 : i32 to vector<8x1xi32>
    %260 = arith.andi %258, %259 : vector<8x1xi32>
    %c31_i32_102 = arith.constant 31 : i32
    %261 = vector.broadcast %c31_i32_102 : i32 to vector<8x1xi32>
    %262 = arith.subi %261, %260 : vector<8x1xi32>
    %cst_103 = arith.constant 5.000000e+00 : f32
    %263 = vector.broadcast %cst_103 : f32 to vector<8x1xf32>
    %264 = arith.cmpf olt, %263, %154 : vector<8x1xf32>
    %c2_i32_104 = arith.constant 2 : i32
    %265 = vector.broadcast %c2_i32_104 : i32 to vector<8x1xi32>
    %266 = arith.select %264, %262, %265 : vector<8x1xi1>, vector<8x1xi32>
    %c5_i32 = arith.constant 5 : i32
    %267 = vector.broadcast %c5_i32 : i32 to vector<8x128xi32>
    %268 = arith.cmpi eq, %130, %267 : vector<8x128xi32>
    %269 = vector.shape_cast %266 : vector<8x1xi32> to vector<8x1xi32>
    %270 = vector.broadcast %269 : vector<8x1xi32> to vector<8x128xi32>
    %271 = arith.select %268, %270, %251 : vector<8x128xi1>, vector<8x128xi32>
    %272 = vector.broadcast %262 : vector<8x1xi32> to vector<8x128xi32>
    %273 = arith.cmpi eq, %130, %272 : vector<8x128xi32>
    %cst_105 = arith.constant -1.000000e+00 : f32
    %274 = vector.broadcast %cst_105 : f32 to vector<8x128xf32>
    %275 = arith.select %273, %274, %255 : vector<8x128xi1>, vector<8x128xf32>
    %cst_106 = arith.constant dense<0xFF800000> : vector<8xf32>
    %276 = vector.multi_reduction <maximumf>, %275, %cst_106 [1] : vector<8x128xf32> to vector<8xf32>
    %277 = vector.shape_cast %276 : vector<8xf32> to vector<8x1xf32>
    %278 = tpu.bitcast %277 : vector<8x1xf32> -> vector<8x1xi32>
    %c31_i32_107 = arith.constant 31 : i32
    %279 = vector.broadcast %c31_i32_107 : i32 to vector<8x1xi32>
    %280 = arith.andi %278, %279 : vector<8x1xi32>
    %c31_i32_108 = arith.constant 31 : i32
    %281 = vector.broadcast %c31_i32_108 : i32 to vector<8x1xi32>
    %282 = arith.subi %281, %280 : vector<8x1xi32>
    %cst_109 = arith.constant 6.000000e+00 : f32
    %283 = vector.broadcast %cst_109 : f32 to vector<8x1xf32>
    %284 = arith.cmpf olt, %283, %154 : vector<8x1xf32>
    %c2_i32_110 = arith.constant 2 : i32
    %285 = vector.broadcast %c2_i32_110 : i32 to vector<8x1xi32>
    %286 = arith.select %284, %282, %285 : vector<8x1xi1>, vector<8x1xi32>
    %c6_i32 = arith.constant 6 : i32
    %287 = vector.broadcast %c6_i32 : i32 to vector<8x128xi32>
    %288 = arith.cmpi eq, %130, %287 : vector<8x128xi32>
    %289 = vector.shape_cast %286 : vector<8x1xi32> to vector<8x1xi32>
    %290 = vector.broadcast %289 : vector<8x1xi32> to vector<8x128xi32>
    %291 = arith.select %288, %290, %271 : vector<8x128xi1>, vector<8x128xi32>
    %292 = vector.broadcast %282 : vector<8x1xi32> to vector<8x128xi32>
    %293 = arith.cmpi eq, %130, %292 : vector<8x128xi32>
    %cst_111 = arith.constant -1.000000e+00 : f32
    %294 = vector.broadcast %cst_111 : f32 to vector<8x128xf32>
    %295 = arith.select %293, %294, %275 : vector<8x128xi1>, vector<8x128xf32>
    %cst_112 = arith.constant dense<0xFF800000> : vector<8xf32>
    %296 = vector.multi_reduction <maximumf>, %295, %cst_112 [1] : vector<8x128xf32> to vector<8xf32>
    %297 = vector.shape_cast %296 : vector<8xf32> to vector<8x1xf32>
    %298 = tpu.bitcast %297 : vector<8x1xf32> -> vector<8x1xi32>
    %c31_i32_113 = arith.constant 31 : i32
    %299 = vector.broadcast %c31_i32_113 : i32 to vector<8x1xi32>
    %300 = arith.andi %298, %299 : vector<8x1xi32>
    %c31_i32_114 = arith.constant 31 : i32
    %301 = vector.broadcast %c31_i32_114 : i32 to vector<8x1xi32>
    %302 = arith.subi %301, %300 : vector<8x1xi32>
    %cst_115 = arith.constant 7.000000e+00 : f32
    %303 = vector.broadcast %cst_115 : f32 to vector<8x1xf32>
    %304 = arith.cmpf olt, %303, %154 : vector<8x1xf32>
    %c2_i32_116 = arith.constant 2 : i32
    %305 = vector.broadcast %c2_i32_116 : i32 to vector<8x1xi32>
    %306 = arith.select %304, %302, %305 : vector<8x1xi1>, vector<8x1xi32>
    %c7_i32 = arith.constant 7 : i32
    %307 = vector.broadcast %c7_i32 : i32 to vector<8x128xi32>
    %308 = arith.cmpi eq, %130, %307 : vector<8x128xi32>
    %309 = vector.shape_cast %306 : vector<8x1xi32> to vector<8x1xi32>
    %310 = vector.broadcast %309 : vector<8x1xi32> to vector<8x128xi32>
    %311 = arith.select %308, %310, %291 : vector<8x128xi1>, vector<8x128xi32>
    %c0_117 = arith.constant 0 : index
    %c0_118 = arith.constant 0 : index
    %312 = vector.load %arg6[%c0_117, %c0_118] : memref<8x128xi32, #tpu.memory_space<vmem>>, vector<8x128xi32>
    tpu.vector_store %arg6[%c0_117, %c0_118], %311 {strides = array<i32>} : memref<8x128xi32, #tpu.memory_space<vmem>>, vector<8x128xi32>,
    return
  }
}

</mosaic_0001>

<llo_original>
// kernel: img2words_forward.1
$region0: #{img2words_forward.1}
  #allocation0 [shape = 'u32[]', space=smem, size = 0x4, offset = 0x4, fixed_abs, tag = 'smem constant byte address 0x4 - core index']
  #allocation1 [shape = 'u32[144,128]{1,0:T(1,128)}', space=vmem, size = 0x12000, scoped, tag = 'internal scratch']
  %s0 = inlined_call_operand.vmem [shape: f32[4,546], index: 0, kind: input, shape index: {}]
  %s1 = inlined_call_operand.vmem [shape: f32[9,8,4], index: 1, kind: input, shape index: {}]
  %s2 = inlined_call_operand.vmem [shape: f32[8,1], index: 2, kind: input, shape index: {}]
  %s3 = inlined_call_operand.vmem [shape: f32[8,128], index: 3, kind: input, shape index: {}]
  %s4 = inlined_call_operand.vmem [shape: f32[1,128], index: 4, kind: input, shape index: {}]
  %s5 = inlined_call_operand.vmem [shape: f32[8,128], index: 5, kind: output, shape index: {0}]
  %s6 = inlined_call_operand.vmem [shape: s32[8,128], index: 6, kind: output, shape index: {1}]
  %7 = xla_tuple %s5, %s6
  %s8 = sld [smem:[#allocation0]]
  $region38: #{img2words_forward.1} parent=0
    _
  %s10 = ssub.s32 1, %s8
  %s11 = scalar_select 0, %s10, %s8
  // Predicated region
  $region2: #{img2words_forward.1} parent=0 // pred_check
    _
  $region3: #{img2words_forward.1} parent=0 // pred_check_branch
    %13 = sbr.rel (0) target = $region5
  $region4: #{img2words_forward.1} parent=0 // pred_region
    _
  $region5: #{img2words_forward.1} parent=0 // pred_fallthru
    _
  // Predicated region
  $region6: #{img2words_forward.1} parent=0 // pred_check
    _
  $region7: #{img2words_forward.1} parent=0 // pred_check_branch
    %15 = sbr.rel (0) target = $region9
  $region8: #{img2words_forward.1} parent=0 // pred_region
    _
  $region9: #{img2words_forward.1} parent=0 // pred_fallthru
    _
  // Predicated region
  $region10: #{img2words_forward.1} parent=0 // pred_check
    _
  $region11: #{img2words_forward.1} parent=0 // pred_check_branch
    %17 = sbr.rel (0) target = $region13
  $region12: #{img2words_forward.1} parent=0 // pred_region
    _
  $region13: #{img2words_forward.1} parent=0 // pred_fallthru
    _
  // Predicated region
  $region14: #{img2words_forward.1} parent=0 // pred_check
    _
  $region15: #{img2words_forward.1} parent=0 // pred_check_branch
    %19 = sbr.rel (0) target = $region17
  $region16: #{img2words_forward.1} parent=0 // pred_region
    _
  $region17: #{img2words_forward.1} parent=0 // pred_fallthru
    _
  // Predicated region
  $region18: #{img2words_forward.1} parent=0 // pred_check
    _
  $region19: #{img2words_forward.1} parent=0 // pred_check_branch
    %21 = sbr.rel (0) target = $region21
  $region20: #{img2words_forward.1} parent=0 // pred_region
    _
  $region21: #{img2words_forward.1} parent=0 // pred_fallthru
    _
  %v22 = vld [vmem:[%s0] sm:$0xff]
  %v23 = vld [vmem:[%s0 + $0x8] sm:$0xff]
  %v24 = vld [vmem:[%s0 + $0x10] sm:$0xf]
  %v25 = vlaneseq
  %v26 = vand.u32 %v25, 127
  %v27 = vadd.s32 %v26, 128
  %v28 = vadd.s32 %v26, 256
  %v29 = vadd.s32 %v26, 384
  %v30 = vand.u32 %v26, 15
  %v31 = vand.u32 %v27, 15
  %v32 = vand.u32 %v28, 15
  %v33 = vand.u32 %v29, 15
  %v34 = vshra.s32 %v26, 4
  %v35 = vshra.s32 %v27, 4
  %v36 = vshra.s32 %v28, 4
  %v37 = vshra.s32 %v29, 4
  %v38 = vand.u32 %v34, 15
  %v39 = vand.u32 %v35, 15
  %v40 = vand.u32 %v36, 15
  %v41 = vand.u32 %v37, 15
  %vm42 = vcmp.gt.s32.totalorder %v38, 0
  %vm43 = vcmp.gt.s32.totalorder %v39, 0
  %vm44 = vcmp.gt.s32.totalorder %v40, 0
  %vm45 = vcmp.gt.s32.totalorder %v41, 0
  %vm46 = vcmp.lt.s32.totalorder %v38, 15
  %vm47 = vcmp.lt.s32.totalorder %v39, 15
  %vm48 = vcmp.lt.s32.totalorder %v40, 15
  %vm49 = vcmp.lt.s32.totalorder %v41, 15
  %vm50 = vcmp.gt.s32.totalorder %v30, 0
  %vm51 = vcmp.gt.s32.totalorder %v31, 0
  %vm52 = vcmp.gt.s32.totalorder %v32, 0
  %vm53 = vcmp.gt.s32.totalorder %v33, 0
  %vm54 = vcmp.lt.s32.totalorder %v30, 15
  %vm55 = vcmp.lt.s32.totalorder %v31, 15
  %vm56 = vcmp.lt.s32.totalorder %v32, 15
  %vm57 = vcmp.lt.s32.totalorder %v33, 15
  %vm58 = vmand %vm42, %vm50
  %vm59 = vmand %vm43, %vm51
  %vm60 = vmand %vm44, %vm52
  %vm61 = vmand %vm45, %vm53
  %v64 = vcombine.high %v22, %v22
  %v65 = vcombine.high %v23, %v23
  %v68 = vsel %vm58, %v22, 0.0
  %v69 = vsel %vm59, %v64, 0.0
  %v70 = vsel %vm60, %v23, 0.0
  %v71 = vsel %vm61, %v65, 0.0
  %v72 = vld [vmem:[%s1] sm:$0xff]
  %74 = vrot.lane.b32.xlu0 %v22, 127
  %v75 = vpop.permute.xlu0 %74
  %76 = vrot.lane.b32.xlu0 %v64, 127
  %v77 = vpop.permute.xlu0 %76
  %78 = vrot.lane.b32.xlu0 %v23, 127
  %v79 = vpop.permute.xlu0 %78
  %80 = vrot.lane.b32.xlu0 %v65, 127
  %v81 = vpop.permute.xlu0 %80
  %82 = vrot.lane.b32.xlu0 %v24, 127
  %v83 = vpop.permute.xlu0 %82
  %vm84 = vcmask 1039360
  %v85 = vsel %vm84, %v75, %v77
  %v86 = vsel %vm84, %v77, %v79
  %v87 = vsel %vm84, %v79, %v81
  %v88 = vsel %vm84, %v81, %v83
  %v93 = vsel %vm42, %v85, 0.0
  %v94 = vsel %vm43, %v86, 0.0
  %v95 = vsel %vm44, %v87, 0.0
  %v96 = vsel %vm45, %v88, 0.0
  %s97 = scalar_lea.vmem %s1, 8
  %v98 = vld [vmem:[%s97] sm:$0xff]
  %vm99 = vcmask 31744
  %v101 = vsel %vm99, %v98, 0
  %vm103 = vcmask 1043456
  %v105 = vsel %vm103, %v93, 0
  %v108 = vsel %vm103, %v94, 0
  %v111 = vsel %vm103, %v95, 0
  %v114 = vsel %vm103, %v96, 0
  %116 = vmatprep.subr.mxu0 %v108
  %117 = vmatpush1.msra.mxu0 %v105
  %118 = vmatprep.subr.mxu0 0.0
  %119 = vmatpush1.msra.mxu0 0.0
  %120 = vmatprep.subr.mxu0 0.0
  %121 = vmatpush1.msra.mxu0 0.0
  %122 = vmatprep.subr.mxu0 0.0
  %123 = vmatpush1.msra.mxu0 0.0
  %124 = vmatprep.subr.mxu0 0.0
  %125 = vmatpush1.msra.mxu0 0.0
  %126 = vmatprep.subr.mxu0 0.0
  %127 = vmatpush1.msra.mxu0 0.0
  %128 = vmatprep.subr.mxu0 0.0
  %129 = vmatpush1.msra.mxu0 0.0
  %130 = vmatprep.subr.mxu0 0.0
  %131 = vmatpush1.msra.mxu0 0.0
  %132 = vmatprep.subr.mxu0 0.0
  %133 = vmatpush1.msra.mxu0 0.0
  %134 = vmatprep.subr.mxu0 0.0
  %135 = vmatpush1.msra.mxu0 0.0
  %136 = vmatprep.subr.mxu0 0.0
  %137 = vmatpush1.msra.mxu0 0.0
  %138 = vmatprep.subr.mxu0 0.0
  %139 = vmatpush1.msra.mxu0 0.0
  %140 = vmatprep.subr.mxu0 0.0
  %141 = vmatpush1.msra.mxu0 0.0
  %142 = vmatprep.subr.mxu0 0.0
  %143 = vmatpush1.msra.mxu0 0.0
  %144 = vmatprep.subr.mxu0 0.0
  %145 = vmatpush1.msra.mxu0 0.0
  %146 = vmatprep.subr.mxu0 0.0
  %147 = vmatpush1.msra.mxu0 0.0
  %148 = vmatprep.subr.mxu0 0.0
  %149 = vmatpush1.msra.mxu0 0.0
  %150 = vmatprep.subr.mxu0 0.0
  %151 = vmatpush1.msra.mxu0 0.0
  %152 = vmatprep.subr.mxu0 0.0
  %153 = vmatpush1.msra.mxu0 0.0
  %154 = vmatprep.subr.mxu0 0.0
  %155 = vmatpush1.msra.mxu0 0.0
  %156 = vmatprep.subr.mxu0 0.0
  %157 = vmatpush1.msra.mxu0 0.0
  %158 = vmatprep.subr.mxu0 0.0
  %159 = vmatpush1.msra.mxu0 0.0
  %160 = vmatprep.subr.mxu0 0.0
  %161 = vmatpush1.msra.mxu0 0.0
  %162 = vmatprep.subr.mxu0 0.0
  %163 = vmatpush1.msra.mxu0 0.0
  %164 = vmatprep.subr.mxu0 0.0
  %165 = vmatpush1.msra.mxu0 0.0
  %166 = vmatprep.subr.mxu0 0.0
  %167 = vmatpush1.msra.mxu0 0.0
  %168 = vmatprep.subr.mxu0 0.0
  %169 = vmatpush1.msra.mxu0 0.0
  %170 = vmatprep.subr.mxu0 0.0
  %171 = vmatpush1.msra.mxu0 0.0
  %172 = vmatprep.subr.mxu0 0.0
  %173 = vmatpush1.msra.mxu0 0.0
  %174 = vmatprep.subr.mxu0 0.0
  %175 = vmatpush1.msra.mxu0 0.0
  %176 = vmatprep.subr.mxu0 0.0
  %177 = vmatpush1.msra.mxu0 0.0
  %178 = vmatprep.subr.mxu0 0.0
  %179 = vmatpush1.msra.mxu0 0.0
  %180 = vmatprep.mubr.f32.mxu0 0.0
  %181 = vmatmul.mubr.f32.gmra.mrb[0].mxu0 %v101
  %v182 = vpop.f32.mrb[0].mxu0
  %v183 = vadd.f32 0.0, %v182
  %v184 = vpop.f32.mrb[0].mxu0
  %v185 = vadd.f32 0.0, %v184
  %186 = vdwg.mxu0
  %187 = vmatprep.subr.mxu0 %v114
  %188 = vmatpush1.msra.mxu0 %v111
  %189 = vmatprep.subr.mxu0 0.0
  %190 = vmatpush1.msra.mxu0 0.0
  %191 = vmatprep.subr.mxu0 0.0
  %192 = vmatpush1.msra.mxu0 0.0
  %193 = vmatprep.subr.mxu0 0.0
  %194 = vmatpush1.msra.mxu0 0.0
  %195 = vmatprep.subr.mxu0 0.0
  %196 = vmatpush1.msra.mxu0 0.0
  %197 = vmatprep.subr.mxu0 0.0
  %198 = vmatpush1.msra.mxu0 0.0
  %199 = vmatprep.subr.mxu0 0.0
  %200 = vmatpush1.msra.mxu0 0.0
  %201 = vmatprep.subr.mxu0 0.0
  %202 = vmatpush1.msra.mxu0 0.0
  %203 = vmatprep.subr.mxu0 0.0
  %204 = vmatpush1.msra.mxu0 0.0
  %205 = vmatprep.subr.mxu0 0.0
  %206 = vmatpush1.msra.mxu0 0.0
  %207 = vmatprep.subr.mxu0 0.0
  %208 = vmatpush1.msra.mxu0 0.0
  %209 = vmatprep.subr.mxu0 0.0
  %210 = vmatpush1.msra.mxu0 0.0
  %211 = vmatprep.subr.mxu0 0.0
  %212 = vmatpush1.msra.mxu0 0.0
  %213 = vmatprep.subr.mxu0 0.0
  %214 = vmatpush1.msra.mxu0 0.0
  %215 = vmatprep.subr.mxu0 0.0
  %216 = vmatpush1.msra.mxu0 0.0
  %217 = vmatprep.subr.mxu0 0.0
  %218 = vmatpush1.msra.mxu0 0.0
  %219 = vmatprep.subr.mxu0 0.0
  %220 = vmatpush1.msra.mxu0 0.0
  %221 = vmatprep.subr.mxu0 0.0
  %222 = vmatpush1.msra.mxu0 0.0
  %223 = vmatprep.subr.mxu0 0.0
  %224 = vmatpush1.msra.mxu0 0.0
  %225 = vmatprep.subr.mxu0 0.0
  %226 = vmatpush1.msra.mxu0 0.0
  %227 = vmatprep.subr.mxu0 0.0
  %228 = vmatpush1.msra.mxu0 0.0
  %229 = vmatprep.subr.mxu0 0.0
  %230 = vmatpush1.msra.mxu0 0.0
  %231 = vmatprep.subr.mxu0 0.0
  %232 = vmatpush1.msra.mxu0 0.0
  %233 = vmatprep.subr.mxu0 0.0
  %234 = vmatpush1.msra.mxu0 0.0
  %235 = vmatprep.subr.mxu0 0.0
  %236 = vmatpush1.msra.mxu0 0.0
  %237 = vmatprep.subr.mxu0 0.0
  %238 = vmatpush1.msra.mxu0 0.0
  %239 = vmatprep.subr.mxu0 0.0
  %240 = vmatpush1.msra.mxu0 0.0
  %241 = vmatprep.subr.mxu0 0.0
  %242 = vmatpush1.msra.mxu0 0.0
  %243 = vmatprep.subr.mxu0 0.0
  %244 = vmatpush1.msra.mxu0 0.0
  %245 = vmatprep.subr.mxu0 0.0
  %246 = vmatpush1.msra.mxu0 0.0
  %247 = vmatprep.subr.mxu0 0.0
  %248 = vmatpush1.msra.mxu0 0.0
  %249 = vmatprep.subr.mxu0 0.0
  %250 = vmatpush1.msra.mxu0 0.0
  %251 = vmatprep.mubr.f32.mxu0 0.0
  %252 = vmatmul.mubr.f32.gmra.mrb[0].mxu0 %v101
  %v253 = vpop.f32.mrb[0].mxu0
  %v254 = vadd.f32 0.0, %v253
  %v255 = vpop.f32.mrb[0].mxu0
  %v256 = vadd.f32 0.0, %v255
  %257 = vdwg.mxu0
  %v259 = vsel %vm99, %v72, 0
  %v262 = vsel %vm103, %v68, 0
  %v265 = vsel %vm103, %v69, 0
  %v268 = vsel %vm103, %v70, 0
  %v271 = vsel %vm103, %v71, 0
  %273 = vmatprep.subr.mxu0 %v265
  %274 = vmatpush1.msra.mxu0 %v262
  %275 = vmatprep.subr.mxu0 0.0
  %276 = vmatpush1.msra.mxu0 0.0
  %277 = vmatprep.subr.mxu0 0.0
  %278 = vmatpush1.msra.mxu0 0.0
  %279 = vmatprep.subr.mxu0 0.0
  %280 = vmatpush1.msra.mxu0 0.0
  %281 = vmatprep.subr.mxu0 0.0
  %282 = vmatpush1.msra.mxu0 0.0
  %283 = vmatprep.subr.mxu0 0.0
  %284 = vmatpush1.msra.mxu0 0.0
  %285 = vmatprep.subr.mxu0 0.0
  %286 = vmatpush1.msra.mxu0 0.0
  %287 = vmatprep.subr.mxu0 0.0
  %288 = vmatpush1.msra.mxu0 0.0
  %289 = vmatprep.subr.mxu0 0.0
  %290 = vmatpush1.msra.mxu0 0.0
  %291 = vmatprep.subr.mxu0 0.0
  %292 = vmatpush1.msra.mxu0 0.0
  %293 = vmatprep.subr.mxu0 0.0
  %294 = vmatpush1.msra.mxu0 0.0
  %295 = vmatprep.subr.mxu0 0.0
  %296 = vmatpush1.msra.mxu0 0.0
  %297 = vmatprep.subr.mxu0 0.0
  %298 = vmatpush1.msra.mxu0 0.0
  %299 = vmatprep.subr.mxu0 0.0
  %300 = vmatpush1.msra.mxu0 0.0
  %301 = vmatprep.subr.mxu0 0.0
  %302 = vmatpush1.msra.mxu0 0.0
  %303 = vmatprep.subr.mxu0 0.0
  %304 = vmatpush1.msra.mxu0 0.0
  %305 = vmatprep.subr.mxu0 0.0
  %306 = vmatpush1.msra.mxu0 0.0
  %307 = vmatprep.subr.mxu0 0.0
  %308 = vmatpush1.msra.mxu0 0.0
  %309 = vmatprep.subr.mxu0 0.0
  %310 = vmatpush1.msra.mxu0 0.0
  %311 = vmatprep.subr.mxu0 0.0
  %312 = vmatpush1.msra.mxu0 0.0
  %313 = vmatprep.subr.mxu0 0.0
  %314 = vmatpush1.msra.mxu0 0.0
  %315 = vmatprep.subr.mxu0 0.0
  %316 = vmatpush1.msra.mxu0 0.0
  %317 = vmatprep.subr.mxu0 0.0
  %318 = vmatpush1.msra.mxu0 0.0
  %319 = vmatprep.subr.mxu0 0.0
  %320 = vmatpush1.msra.mxu0 0.0
  %321 = vmatprep.subr.mxu0 0.0
  %322 = vmatpush1.msra.mxu0 0.0
  %323 = vmatprep.subr.mxu0 0.0
  %324 = vmatpush1.msra.mxu0 0.0
  %325 = vmatprep.subr.mxu0 0.0
  %326 = vmatpush1.msra.mxu0 0.0
  %327 = vmatprep.subr.mxu0 0.0
  %328 = vmatpush1.msra.mxu0 0.0
  %329 = vmatprep.subr.mxu0 0.0
  %330 = vmatpush1.msra.mxu0 0.0
  %331 = vmatprep.subr.mxu0 0.0
  %332 = vmatpush1.msra.mxu0 0.0
  %333 = vmatprep.subr.mxu0 0.0
  %334 = vmatpush1.msra.mxu0 0.0
  %335 = vmatprep.subr.mxu0 0.0
  %336 = vmatpush1.msra.mxu0 0.0
  %337 = vmatprep.mubr.f32.mxu0 0.0
  %338 = vmatmul.mubr.f32.gmra.mrb[0].mxu0 %v259
  %v339 = vpop.f32.mrb[0].mxu0
  %v340 = vadd.f32 %v183, %v339
  %v341 = vpop.f32.mrb[0].mxu0
  %v342 = vadd.f32 %v185, %v341
  %343 = vdwg.mxu0
  %344 = vmatprep.subr.mxu0 %v271
  %345 = vmatpush1.msra.mxu0 %v268
  %346 = vmatprep.subr.mxu0 0.0
  %347 = vmatpush1.msra.mxu0 0.0
  %348 = vmatprep.subr.mxu0 0.0
  %349 = vmatpush1.msra.mxu0 0.0
  %350 = vmatprep.subr.mxu0 0.0
  %351 = vmatpush1.msra.mxu0 0.0
  %352 = vmatprep.subr.mxu0 0.0
  %353 = vmatpush1.msra.mxu0 0.0
  %354 = vmatprep.subr.mxu0 0.0
  %355 = vmatpush1.msra.mxu0 0.0
  %356 = vmatprep.subr.mxu0 0.0
  %357 = vmatpush1.msra.mxu0 0.0
  %358 = vmatprep.subr.mxu0 0.0
  %359 = vmatpush1.msra.mxu0 0.0
  %360 = vmatprep.subr.mxu0 0.0
  %361 = vmatpush1.msra.mxu0 0.0
  %362 = vmatprep.subr.mxu0 0.0
  %363 = vmatpush1.msra.mxu0 0.0
  %364 = vmatprep.subr.mxu0 0.0
  %365 = vmatpush1.msra.mxu0 0.0
  %366 = vmatprep.subr.mxu0 0.0
  %367 = vmatpush1.msra.mxu0 0.0
  %368 = vmatprep.subr.mxu0 0.0
  %369 = vmatpush1.msra.mxu0 0.0
  %370 = vmatprep.subr.mxu0 0.0
  %371 = vmatpush1.msra.mxu0 0.0
  %372 = vmatprep.subr.mxu0 0.0
  %373 = vmatpush1.msra.mxu0 0.0
  %374 = vmatprep.subr.mxu0 0.0
  %375 = vmatpush1.msra.mxu0 0.0
  %376 = vmatprep.subr.mxu0 0.0
  %377 = vmatpush1.msra.mxu0 0.0
  %378 = vmatprep.subr.mxu0 0.0
  %379 = vmatpush1.msra.mxu0 0.0
  %380 = vmatprep.subr.mxu0 0.0
  %381 = vmatpush1.msra.mxu0 0.0
  %382 = vmatprep.subr.mxu0 0.0
  %383 = vmatpush1.msra.mxu0 0.0
  %384 = vmatprep.subr.mxu0 0.0
  %385 = vmatpush1.msra.mxu0 0.0
  %386 = vmatprep.subr.mxu0 0.0
  %387 = vmatpush1.msra.mxu0 0.0
  %388 = vmatprep.subr.mxu0 0.0
  %389 = vmatpush1.msra.mxu0 0.0
  %390 = vmatprep.subr.mxu0 0.0
  %391 = vmatpush1.msra.mxu0 0.0
  %392 = vmatprep.subr.mxu0 0.0
  %393 = vmatpush1.msra.mxu0 0.0
  %394 = vmatprep.subr.mxu0 0.0
  %395 = vmatpush1.msra.mxu0 0.0
  %396 = vmatprep.subr.mxu0 0.0
  %397 = vmatpush1.msra.mxu0 0.0
  %398 = vmatprep.subr.mxu0 0.0
  %399 = vmatpush1.msra.mxu0 0.0
  %400 = vmatprep.subr.mxu0 0.0
  %401 = vmatpush1.msra.mxu0 0.0
  %402 = vmatprep.subr.mxu0 0.0
  %403 = vmatpush1.msra.mxu0 0.0
  %404 = vmatprep.subr.mxu0 0.0
  %405 = vmatpush1.msra.mxu0 0.0
  %406 = vmatprep.subr.mxu0 0.0
  %407 = vmatpush1.msra.mxu0 0.0
  %408 = vmatprep.mubr.f32.mxu0 0.0
  %409 = vmatmul.mubr.f32.gmra.mrb[0].mxu0 %v259
  %v410 = vpop.f32.mrb[0].mxu0
  %v411 = vadd.f32 %v254, %v410
  %v412 = vpop.f32.mrb[0].mxu0
  %v413 = vadd.f32 %v256, %v412
  %414 = vdwg.mxu0
  %vm415 = vmand %vm42, %vm54
  %vm416 = vmand %vm43, %vm55
  %vm417 = vmand %vm44, %vm56
  %vm418 = vmand %vm45, %vm57
  %419 = vrot.lane.b32.xlu0 %v22, 126
  %v420 = vpop.permute.xlu0 %419
  %421 = vrot.lane.b32.xlu0 %v64, 126
  %v422 = vpop.permute.xlu0 %421
  %423 = vrot.lane.b32.xlu0 %v23, 126
  %v424 = vpop.permute.xlu0 %423
  %425 = vrot.lane.b32.xlu0 %v65, 126
  %v426 = vpop.permute.xlu0 %425
  %427 = vrot.lane.b32.xlu0 %v24, 126
  %v428 = vpop.permute.xlu0 %427
  %vm429 = vcmask 1031168
  %v430 = vsel %vm429, %v420, %v422
  %v431 = vsel %vm429, %v422, %v424
  %v432 = vsel %vm429, %v424, %v426
  %v433 = vsel %vm429, %v426, %v428
  %v438 = vsel %vm415, %v430, 0.0
  %v439 = vsel %vm416, %v431, 0.0
  %v440 = vsel %vm417, %v432, 0.0
  %v441 = vsel %vm418, %v433, 0.0
  %s442 = scalar_lea.vmem %s1, 16
  %v443 = vld [vmem:[%s442] sm:$0xff]
  %v445 = vsel %vm99, %v443, 0
  %v448 = vsel %vm103, %v438, 0
  %v451 = vsel %vm103, %v439, 0
  %v454 = vsel %vm103, %v440, 0
  %v457 = vsel %vm103, %v441, 0
  %459 = vmatprep.subr.mxu0 %v451
  %460 = vmatpush1.msra.mxu0 %v448
  %461 = vmatprep.subr.mxu0 0.0
  %462 = vmatpush1.msra.mxu0 0.0
  %463 = vmatprep.subr.mxu0 0.0
  %464 = vmatpush1.msra.mxu0 0.0
  %465 = vmatprep.subr.mxu0 0.0
  %466 = vmatpush1.msra.mxu0 0.0
  %467 = vmatprep.subr.mxu0 0.0
  %468 = vmatpush1.msra.mxu0 0.0
  %469 = vmatprep.subr.mxu0 0.0
  %470 = vmatpush1.msra.mxu0 0.0
  %471 = vmatprep.subr.mxu0 0.0
  %472 = vmatpush1.msra.mxu0 0.0
  %473 = vmatprep.subr.mxu0 0.0
  %474 = vmatpush1.msra.mxu0 0.0
  %475 = vmatprep.subr.mxu0 0.0
  %476 = vmatpush1.msra.mxu0 0.0
  %477 = vmatprep.subr.mxu0 0.0
  %478 = vmatpush1.msra.mxu0 0.0
  %479 = vmatprep.subr.mxu0 0.0
  %480 = vmatpush1.msra.mxu0 0.0
  %481 = vmatprep.subr.mxu0 0.0
  %482 = vmatpush1.msra.mxu0 0.0
  %483 = vmatprep.subr.mxu0 0.0
  %484 = vmatpush1.msra.mxu0 0.0
  %485 = vmatprep.subr.mxu0 0.0
  %486 = vmatpush1.msra.mxu0 0.0
  %487 = vmatprep.subr.mxu0 0.0
  %488 = vmatpush1.msra.mxu0 0.0
  %489 = vmatprep.subr.mxu0 0.0
  %490 = vmatpush1.msra.mxu0 0.0
  %491 = vmatprep.subr.mxu0 0.0
  %492 = vmatpush1.msra.mxu0 0.0
  %493 = vmatprep.subr.mxu0 0.0
  %494 = vmatpush1.msra.mxu0 0.0
  %495 = vmatprep.subr.mxu0 0.0
  %496 = vmatpush1.msra.mxu0 0.0
  %497 = vmatprep.subr.mxu0 0.0
  %498 = vmatpush1.msra.mxu0 0.0
  %499 = vmatprep.subr.mxu0 0.0
  %500 = vmatpush1.msra.mxu0 0.0
  %501 = vmatprep.subr.mxu0 0.0
  %502 = vmatpush1.msra.mxu0 0.0
  %503 = vmatprep.subr.mxu0 0.0
  %504 = vmatpush1.msra.mxu0 0.0
  %505 = vmatprep.subr.mxu0 0.0
  %506 = vmatpush1.msra.mxu0 0.0
  %507 = vmatprep.subr.mxu0 0.0
  %508 = vmatpush1.msra.mxu0 0.0
  %509 = vmatprep.subr.mxu0 0.0
  %510 = vmatpush1.msra.mxu0 0.0
  %511 = vmatprep.subr.mxu0 0.0
  %512 = vmatpush1.msra.mxu0 0.0
  %513 = vmatprep.subr.mxu0 0.0
  %514 = vmatpush1.msra.mxu0 0.0
  %515 = vmatprep.subr.mxu0 0.0
  %516 = vmatpush1.msra.mxu0 0.0
  %517 = vmatprep.subr.mxu0 0.0
  %518 = vmatpush1.msra.mxu0 0.0
  %519 = vmatprep.subr.mxu0 0.0
  %520 = vmatpush1.msra.mxu0 0.0
  %521 = vmatprep.subr.mxu0 0.0
  %522 = vmatpush1.msra.mxu0 0.0
  %523 = vmatprep.mubr.f32.mxu0 0.0
  %524 = vmatmul.mubr.f32.gmra.mrb[0].mxu0 %v445
  %v525 = vpop.f32.mrb[0].mxu0
  %v526 = vadd.f32 0.0, %v525
  %v527 = vpop.f32.mrb[0].mxu0
  %v528 = vadd.f32 0.0, %v527
  %529 = vdwg.mxu0
  %530 = vmatprep.subr.mxu0 %v457
  %531 = vmatpush1.msra.mxu0 %v454
  %532 = vmatprep.subr.mxu0 0.0
  %533 = vmatpush1.msra.mxu0 0.0
  %534 = vmatprep.subr.mxu0 0.0
  %535 = vmatpush1.msra.mxu0 0.0
  %536 = vmatprep.subr.mxu0 0.0
  %537 = vmatpush1.msra.mxu0 0.0
  %538 = vmatprep.subr.mxu0 0.0
  %539 = vmatpush1.msra.mxu0 0.0
  %540 = vmatprep.subr.mxu0 0.0
  %541 = vmatpush1.msra.mxu0 0.0
  %542 = vmatprep.subr.mxu0 0.0
  %543 = vmatpush1.msra.mxu0 0.0
  %544 = vmatprep.subr.mxu0 0.0
  %545 = vmatpush1.msra.mxu0 0.0
  %546 = vmatprep.subr.mxu0 0.0
  %547 = vmatpush1.msra.mxu0 0.0
  %548 = vmatprep.subr.mxu0 0.0
  %549 = vmatpush1.msra.mxu0 0.0
  %550 = vmatprep.subr.mxu0 0.0
  %551 = vmatpush1.msra.mxu0 0.0
  %552 = vmatprep.subr.mxu0 0.0
  %553 = vmatpush1.msra.mxu0 0.0
  %554 = vmatprep.subr.mxu0 0.0
  %555 = vmatpush1.msra.mxu0 0.0
  %556 = vmatprep.subr.mxu0 0.0
  %557 = vmatpush1.msra.mxu0 0.0
  %558 = vmatprep.subr.mxu0 0.0
  %559 = vmatpush1.msra.mxu0 0.0
  %560 = vmatprep.subr.mxu0 0.0
  %561 = vmatpush1.msra.mxu0 0.0
  %562 = vmatprep.subr.mxu0 0.0
  %563 = vmatpush1.msra.mxu0 0.0
  %564 = vmatprep.subr.mxu0 0.0
  %565 = vmatpush1.msra.mxu0 0.0
  %566 = vmatprep.subr.mxu0 0.0
  %567 = vmatpush1.msra.mxu0 0.0
  %568 = vmatprep.subr.mxu0 0.0
  %569 = vmatpush1.msra.mxu0 0.0
  %570 = vmatprep.subr.mxu0 0.0
  %571 = vmatpush1.msra.mxu0 0.0
  %572 = vmatprep.subr.mxu0 0.0
  %573 = vmatpush1.msra.mxu0 0.0
  %574 = vmatprep.subr.mxu0 0.0
  %575 = vmatpush1.msra.mxu0 0.0
  %576 = vmatprep.subr.mxu0 0.0
  %577 = vmatpush1.msra.mxu0 0.0
  %578 = vmatprep.subr.mxu0 0.0
  %579 = vmatpush1.msra.mxu0 0.0
  %580 = vmatprep.subr.mxu0 0.0
  %581 = vmatpush1.msra.mxu0 0.0
  %582 = vmatprep.subr.mxu0 0.0
  %583 = vmatpush1.msra.mxu0 0.0
  %584 = vmatprep.subr.mxu0 0.0
  %585 = vmatpush1.msra.mxu0 0.0
  %586 = vmatprep.subr.mxu0 0.0
  %587 = vmatpush1.msra.mxu0 0.0
  %588 = vmatprep.subr.mxu0 0.0
  %589 = vmatpush1.msra.mxu0 0.0
  %590 = vmatprep.subr.mxu0 0.0
  %591 = vmatpush1.msra.mxu0 0.0
  %592 = vmatprep.subr.mxu0 0.0
  %593 = vmatpush1.msra.mxu0 0.0
  %594 = vmatprep.mubr.f32.mxu0 0.0
  %595 = vmatmul.mubr.f32.gmra.mrb[0].mxu0 %v445
  %v596 = vpop.f32.mrb[0].mxu0
  %v597 = vadd.f32 0.0, %v596
  %v598 = vpop.f32.mrb[0].mxu0
  %v599 = vadd.f32 0.0, %v598
  %600 = vdwg.mxu0
  %v601 = vadd.f32 %v340, %v526
  %v602 = vadd.f32 %v342, %v528
  %v603 = vadd.f32 %v411, %v597
  %v604 = vadd.f32 %v413, %v599
  %605 = vrot.lane.b32.xlu0 %v22, 112
  %v606 = vpop.permute.xlu0 %605
  %607 = vrot.lane.b32.xlu0 %v64, 112
  %v608 = vpop.permute.xlu0 %607
  %609 = vrot.lane.b32.xlu0 %v23, 112
  %v610 = vpop.permute.xlu0 %609
  %611 = vrot.lane.b32.xlu0 %v65, 112
  %v612 = vpop.permute.xlu0 %611
  %613 = vrot.lane.b32.xlu0 %v24, 112
  %v614 = vpop.permute.xlu0 %613
  %vm615 = vcmask 916480
  %v616 = vsel %vm615, %v606, %v608
  %v617 = vsel %vm615, %v608, %v610
  %v618 = vsel %vm615, %v610, %v612
  %v619 = vsel %vm615, %v612, %v614
  %v624 = vsel %vm50, %v616, 0.0
  %v625 = vsel %vm51, %v617, 0.0
  %v626 = vsel %vm52, %v618, 0.0
  %v627 = vsel %vm53, %v619, 0.0
  %s628 = scalar_lea.vmem %s1, 24
  %v629 = vld [vmem:[%s628] sm:$0xff]
  %v631 = vsel %vm99, %v629, 0
  %v634 = vsel %vm103, %v624, 0
  %v637 = vsel %vm103, %v625, 0
  %v640 = vsel %vm103, %v626, 0
  %v643 = vsel %vm103, %v627, 0
  %645 = vmatprep.subr.mxu0 %v637
  %646 = vmatpush1.msra.mxu0 %v634
  %647 = vmatprep.subr.mxu0 0.0
  %648 = vmatpush1.msra.mxu0 0.0
  %649 = vmatprep.subr.mxu0 0.0
  %650 = vmatpush1.msra.mxu0 0.0
  %651 = vmatprep.subr.mxu0 0.0
  %652 = vmatpush1.msra.mxu0 0.0
  %653 = vmatprep.subr.mxu0 0.0
  %654 = vmatpush1.msra.mxu0 0.0
  %655 = vmatprep.subr.mxu0 0.0
  %656 = vmatpush1.msra.mxu0 0.0
  %657 = vmatprep.subr.mxu0 0.0
  %658 = vmatpush1.msra.mxu0 0.0
  %659 = vmatprep.subr.mxu0 0.0
  %660 = vmatpush1.msra.mxu0 0.0
  %661 = vmatprep.subr.mxu0 0.0
  %662 = vmatpush1.msra.mxu0 0.0
  %663 = vmatprep.subr.mxu0 0.0
  %664 = vmatpush1.msra.mxu0 0.0
  %665 = vmatprep.subr.mxu0 0.0
  %666 = vmatpush1.msra.mxu0 0.0
  %667 = vmatprep.subr.mxu0 0.0
  %668 = vmatpush1.msra.mxu0 0.0
  %669 = vmatprep.subr.mxu0 0.0
  %670 = vmatpush1.msra.mxu0 0.0
  %671 = vmatprep.subr.mxu0 0.0
  %672 = vmatpush1.msra.mxu0 0.0
  %673 = vmatprep.subr.mxu0 0.0
  %674 = vmatpush1.msra.mxu0 0.0
  %675 = vmatprep.subr.mxu0 0.0
  %676 = vmatpush1.msra.mxu0 0.0
  %677 = vmatprep.subr.mxu0 0.0
  %678 = vmatpush1.msra.mxu0 0.0
  %679 = vmatprep.subr.mxu0 0.0
  %680 = vmatpush1.msra.mxu0 0.0
  %681 = vmatprep.subr.mxu0 0.0
  %682 = vmatpush1.msra.mxu0 0.0
  %683 = vmatprep.subr.mxu0 0.0
  %684 = vmatpush1.msra.mxu0 0.0
  %685 = vmatprep.subr.mxu0 0.0
  %686 = vmatpush1.msra.mxu0 0.0
  %687 = vmatprep.subr.mxu0 0.0
  %688 = vmatpush1.msra.mxu0 0.0
  %689 = vmatprep.subr.mxu0 0.0
  %690 = vmatpush1.msra.mxu0 0.0
  %691 = vmatprep.subr.mxu0 0.0
  %692 = vmatpush1.msra.mxu0 0.0
  %693 = vmatprep.subr.mxu0 0.0
  %694 = vmatpush1.msra.mxu0 0.0
  %695 = vmatprep.subr.mxu0 0.0
  %696 = vmatpush1.msra.mxu0 0.0
  %697 = vmatprep.subr.mxu0 0.0
  %698 = vmatpush1.msra.mxu0 0.0
  %699 = vmatprep.subr.mxu0 0.0
  %700 = vmatpush1.msra.mxu0 0.0
  %701 = vmatprep.subr.mxu0 0.0
  %702 = vmatpush1.msra.mxu0 0.0
  %703 = vmatprep.subr.mxu0 0.0
  %704 = vmatpush1.msra.mxu0 0.0
  %705 = vmatprep.subr.mxu0 0.0
  %706 = vmatpush1.msra.mxu0 0.0
  %707 = vmatprep.subr.mxu0 0.0
  %708 = vmatpush1.msra.mxu0 0.0
  %709 = vmatprep.mubr.f32.mxu0 0.0
  %710 = vmatmul.mubr.f32.gmra.mrb[0].mxu0 %v631
  %v711 = vpop.f32.mrb[0].mxu0
  %v712 = vadd.f32 0.0, %v711
  %v713 = vpop.f32.mrb[0].mxu0
  %v714 = vadd.f32 0.0, %v713
  %715 = vdwg.mxu0
  %716 = vmatprep.subr.mxu0 %v643
  %717 = vmatpush1.msra.mxu0 %v640
  %718 = vmatprep.subr.mxu0 0.0
  %719 = vmatpush1.msra.mxu0 0.0
  %720 = vmatprep.subr.mxu0 0.0
  %721 = vmatpush1.msra.mxu0 0.0
  %722 = vmatprep.subr.mxu0 0.0
  %723 = vmatpush1.msra.mxu0 0.0
  %724 = vmatprep.subr.mxu0 0.0
  %725 = vmatpush1.msra.mxu0 0.0
  %726 = vmatprep.subr.mxu0 0.0
  %727 = vmatpush1.msra.mxu0 0.0
  %728 = vmatprep.subr.mxu0 0.0
  %729 = vmatpush1.msra.mxu0 0.0
  %730 = vmatprep.subr.mxu0 0.0
  %731 = vmatpush1.msra.mxu0 0.0
  %732 = vmatprep.subr.mxu0 0.0
  %733 = vmatpush1.msra.mxu0 0.0
  %734 = vmatprep.subr.mxu0 0.0
  %735 = vmatpush1.msra.mxu0 0.0
  %736 = vmatprep.subr.mxu0 0.0
  %737 = vmatpush1.msra.mxu0 0.0
  %738 = vmatprep.subr.mxu0 0.0
  %739 = vmatpush1.msra.mxu0 0.0
  %740 = vmatprep.subr.mxu0 0.0
  %741 = vmatpush1.msra.mxu0 0.0
  %742 = vmatprep.subr.mxu0 0.0
  %743 = vmatpush1.msra.mxu0 0.0
  %744 = vmatprep.subr.mxu0 0.0
  %745 = vmatpush1.msra.mxu0 0.0
  %746 = vmatprep.subr.mxu0 0.0
  %747 = vmatpush1.msra.mxu0 0.0
  %748 = vmatprep.subr.mxu0 0.0
  %749 = vmatpush1.msra.mxu0 0.0
  %750 = vmatprep.subr.mxu0 0.0
  %751 = vmatpush1.msra.mxu0 0.0
  %752 = vmatprep.subr.mxu0 0.0
  %753 = vmatpush1.msra.mxu0 0.0
  %754 = vmatprep.subr.mxu0 0.0
  %755 = vmatpush1.msra.mxu0 0.0
  %756 = vmatprep.subr.mxu0 0.0
  %757 = vmatpush1.msra.mxu0 0.0
  %758 = vmatprep.subr.mxu0 0.0
  %759 = vmatpush1.msra.mxu0 0.0
  %760 = vmatprep.subr.mxu0 0.0
  %761 = vmatpush1.msra.mxu0 0.0
  %762 = vmatprep.subr.mxu0 0.0
  %763 = vmatpush1.msra.mxu0 0.0
  %764 = vmatprep.subr.mxu0 0.0
  %765 = vmatpush1.msra.mxu0 0.0
  %766 = vmatprep.subr.mxu0 0.0
  %767 = vmatpush1.msra.mxu0 0.0
  %768 = vmatprep.subr.mxu0 0.0
  %769 = vmatpush1.msra.mxu0 0.0
  %770 = vmatprep.subr.mxu0 0.0
  %771 = vmatpush1.msra.mxu0 0.0
  %772 = vmatprep.subr.mxu0 0.0
  %773 = vmatpush1.msra.mxu0 0.0
  %774 = vmatprep.subr.mxu0 0.0
  %775 = vmatpush1.msra.mxu0 0.0
  %776 = vmatprep.subr.mxu0 0.0
  %777 = vmatpush1.msra.mxu0 0.0
  %778 = vmatprep.subr.mxu0 0.0
  %779 = vmatpush1.msra.mxu0 0.0
  %780 = vmatprep.mubr.f32.mxu0 0.0
  %781 = vmatmul.mubr.f32.gmra.mrb[0].mxu0 %v631
  %v782 = vpop.f32.mrb[0].mxu0
  %v783 = vadd.f32 0.0, %v782
  %v784 = vpop.f32.mrb[0].mxu0
  %v785 = vadd.f32 0.0, %v784
  %786 = vdwg.mxu0
  %v787 = vadd.f32 %v601, %v712
  %v788 = vadd.f32 %v602, %v714
  %v789 = vadd.f32 %v603, %v783
  %v790 = vadd.f32 %v604, %v785
  %s791 = scalar_lea.vmem %s1, 32
  %v792 = vld [vmem:[%s791] sm:$0xff]
  %793 = vrot.lane.b32.xlu0 %v22, 111
  %v794 = vpop.permute.xlu0 %793
  %795 = vrot.lane.b32.xlu0 %v64, 111
  %v796 = vpop.permute.xlu0 %795
  %797 = vrot.lane.b32.xlu0 %v23, 111
  %v798 = vpop.permute.xlu0 %797
  %799 = vrot.lane.b32.xlu0 %v65, 111
  %v800 = vpop.permute.xlu0 %799
  %801 = vrot.lane.b32.xlu0 %v24, 111
  %v802 = vpop.permute.xlu0 %801
  %vm803 = vcmask 908288
  %v804 = vsel %vm803, %v794, %v796
  %v805 = vsel %vm803, %v796, %v798
  %v806 = vsel %vm803, %v798, %v800
  %v807 = vsel %vm803, %v800, %v802
  %v809 = vsel %vm99, %v792, 0
  %v811 = vsel %vm103, %v804, 0
  %v813 = vsel %vm103, %v805, 0
  %v815 = vsel %vm103, %v806, 0
  %v817 = vsel %vm103, %v807, 0
  %819 = vmatprep.subr.mxu0 %v813
  %820 = vmatpush1.msra.mxu0 %v811
  %821 = vmatprep.subr.mxu0 0.0
  %822 = vmatpush1.msra.mxu0 0.0
  %823 = vmatprep.subr.mxu0 0.0
  %824 = vmatpush1.msra.mxu0 0.0
  %825 = vmatprep.subr.mxu0 0.0
  %826 = vmatpush1.msra.mxu0 0.0
  %827 = vmatprep.subr.mxu0 0.0
  %828 = vmatpush1.msra.mxu0 0.0
  %829 = vmatprep.subr.mxu0 0.0
  %830 = vmatpush1.msra.mxu0 0.0
  %831 = vmatprep.subr.mxu0 0.0
  %832 = vmatpush1.msra.mxu0 0.0
  %833 = vmatprep.subr.mxu0 0.0
  %834 = vmatpush1.msra.mxu0 0.0
  %835 = vmatprep.subr.mxu0 0.0
  %836 = vmatpush1.msra.mxu0 0.0
  %837 = vmatprep.subr.mxu0 0.0
  %838 = vmatpush1.msra.mxu0 0.0
  %839 = vmatprep.subr.mxu0 0.0
  %840 = vmatpush1.msra.mxu0 0.0
  %841 = vmatprep.subr.mxu0 0.0
  %842 = vmatpush1.msra.mxu0 0.0
  %843 = vmatprep.subr.mxu0 0.0
  %844 = vmatpush1.msra.mxu0 0.0
  %845 = vmatprep.subr.mxu0 0.0
  %846 = vmatpush1.msra.mxu0 0.0
  %847 = vmatprep.subr.mxu0 0.0
  %848 = vmatpush1.msra.mxu0 0.0
  %849 = vmatprep.subr.mxu0 0.0
  %850 = vmatpush1.msra.mxu0 0.0
  %851 = vmatprep.subr.mxu0 0.0
  %852 = vmatpush1.msra.mxu0 0.0
  %853 = vmatprep.subr.mxu0 0.0
  %854 = vmatpush1.msra.mxu0 0.0
  %855 = vmatprep.subr.mxu0 0.0
  %856 = vmatpush1.msra.mxu0 0.0
  %857 = vmatprep.subr.mxu0 0.0
  %858 = vmatpush1.msra.mxu0 0.0
  %859 = vmatprep.subr.mxu0 0.0
  %860 = vmatpush1.msra.mxu0 0.0
  %861 = vmatprep.subr.mxu0 0.0
  %862 = vmatpush1.msra.mxu0 0.0
  %863 = vmatprep.subr.mxu0 0.0
  %864 = vmatpush1.msra.mxu0 0.0
  %865 = vmatprep.subr.mxu0 0.0
  %866 = vmatpush1.msra.mxu0 0.0
  %867 = vmatprep.subr.mxu0 0.0
  %868 = vmatpush1.msra.mxu0 0.0
  %869 = vmatprep.subr.mxu0 0.0
  %870 = vmatpush1.msra.mxu0 0.0
  %871 = vmatprep.subr.mxu0 0.0
  %872 = vmatpush1.msra.mxu0 0.0
  %873 = vmatprep.subr.mxu0 0.0
  %874 = vmatpush1.msra.mxu0 0.0
  %875 = vmatprep.subr.mxu0 0.0
  %876 = vmatpush1.msra.mxu0 0.0
  %877 = vmatprep.subr.mxu0 0.0
  %878 = vmatpush1.msra.mxu0 0.0
  %879 = vmatprep.subr.mxu0 0.0
  %880 = vmatpush1.msra.mxu0 0.0
  %881 = vmatprep.subr.mxu0 0.0
  %882 = vmatpush1.msra.mxu0 0.0
  %883 = vmatprep.mubr.f32.mxu0 0.0
  %884 = vmatmul.mubr.f32.gmra.mrb[0].mxu0 %v809
  %v885 = vpop.f32.mrb[0].mxu0
  %v886 = vadd.f32 0.0, %v885
  %v887 = vpop.f32.mrb[0].mxu0
  %v888 = vadd.f32 0.0, %v887
  %889 = vdwg.mxu0
  %890 = vmatprep.subr.mxu0 %v817
  %891 = vmatpush1.msra.mxu0 %v815
  %892 = vmatprep.subr.mxu0 0.0
  %893 = vmatpush1.msra.mxu0 0.0
  %894 = vmatprep.subr.mxu0 0.0
  %895 = vmatpush1.msra.mxu0 0.0
  %896 = vmatprep.subr.mxu0 0.0
  %897 = vmatpush1.msra.mxu0 0.0
  %898 = vmatprep.subr.mxu0 0.0
  %899 = vmatpush1.msra.mxu0 0.0
  %900 = vmatprep.subr.mxu0 0.0
  %901 = vmatpush1.msra.mxu0 0.0
  %902 = vmatprep.subr.mxu0 0.0
  %903 = vmatpush1.msra.mxu0 0.0
  %904 = vmatprep.subr.mxu0 0.0
  %905 = vmatpush1.msra.mxu0 0.0
  %906 = vmatprep.subr.mxu0 0.0
  %907 = vmatpush1.msra.mxu0 0.0
  %908 = vmatprep.subr.mxu0 0.0
  %909 = vmatpush1.msra.mxu0 0.0
  %910 = vmatprep.subr.mxu0 0.0
  %911 = vmatpush1.msra.mxu0 0.0
  %912 = vmatprep.subr.mxu0 0.0
  %913 = vmatpush1.msra.mxu0 0.0
  %914 = vmatprep.subr.mxu0 0.0
  %915 = vmatpush1.msra.mxu0 0.0
  %916 = vmatprep.subr.mxu0 0.0
  %917 = vmatpush1.msra.mxu0 0.0
  %918 = vmatprep.subr.mxu0 0.0
  %919 = vmatpush1.msra.mxu0 0.0
  %920 = vmatprep.subr.mxu0 0.0
  %921 = vmatpush1.msra.mxu0 0.0
  %922 = vmatprep.subr.mxu0 0.0
  %923 = vmatpush1.msra.mxu0 0.0
  %924 = vmatprep.subr.mxu0 0.0
  %925 = vmatpush1.msra.mxu0 0.0
  %926 = vmatprep.subr.mxu0 0.0
  %927 = vmatpush1.msra.mxu0 0.0
  %928 = vmatprep.subr.mxu0 0.0
  %929 = vmatpush1.msra.mxu0 0.0
  %930 = vmatprep.subr.mxu0 0.0
  %931 = vmatpush1.msra.mxu0 0.0
  %932 = vmatprep.subr.mxu0 0.0
  %933 = vmatpush1.msra.mxu0 0.0
  %934 = vmatprep.subr.mxu0 0.0
  %935 = vmatpush1.msra.mxu0 0.0
  %936 = vmatprep.subr.mxu0 0.0
  %937 = vmatpush1.msra.mxu0 0.0
  %938 = vmatprep.subr.mxu0 0.0
  %939 = vmatpush1.msra.mxu0 0.0
  %940 = vmatprep.subr.mxu0 0.0
  %941 = vmatpush1.msra.mxu0 0.0
  %942 = vmatprep.subr.mxu0 0.0
  %943 = vmatpush1.msra.mxu0 0.0
  %944 = vmatprep.subr.mxu0 0.0
  %945 = vmatpush1.msra.mxu0 0.0
  %946 = vmatprep.subr.mxu0 0.0
  %947 = vmatpush1.msra.mxu0 0.0
  %948 = vmatprep.subr.mxu0 0.0
  %949 = vmatpush1.msra.mxu0 0.0
  %950 = vmatprep.subr.mxu0 0.0
  %951 = vmatpush1.msra.mxu0 0.0
  %952 = vmatprep.subr.mxu0 0.0
  %953 = vmatpush1.msra.mxu0 0.0
  %954 = vmatprep.mubr.f32.mxu0 0.0
  %955 = vmatmul.mubr.f32.gmra.mrb[0].mxu0 %v809
  %v956 = vpop.f32.mrb[0].mxu0
  %v957 = vadd.f32 0.0, %v956
  %v958 = vpop.f32.mrb[0].mxu0
  %v959 = vadd.f32 0.0, %v958
  %960 = vdwg.mxu0
  %v961 = vadd.f32 %v787, %v886
  %v962 = vadd.f32 %v788, %v888
  %v963 = vadd.f32 %v789, %v957
  %v964 = vadd.f32 %v790, %v959
  %965 = vrot.lane.b32.xlu0 %v22, 110
  %v966 = vpop.permute.xlu0 %965
  %967 = vrot.lane.b32.xlu0 %v64, 110
  %v968 = vpop.permute.xlu0 %967
  %969 = vrot.lane.b32.xlu0 %v23, 110
  %v970 = vpop.permute.xlu0 %969
  %971 = vrot.lane.b32.xlu0 %v65, 110
  %v972 = vpop.permute.xlu0 %971
  %973 = vrot.lane.b32.xlu0 %v24, 110
  %v974 = vpop.permute.xlu0 %973
  %vm975 = vcmask 900096
  %v976 = vsel %vm975, %v966, %v968
  %v977 = vsel %vm975, %v968, %v970
  %v978 = vsel %vm975, %v970, %v972
  %v979 = vsel %vm975, %v972, %v974
  %v984 = vsel %vm54, %v976, 0.0
  %v985 = vsel %vm55, %v977, 0.0
  %v986 = vsel %vm56, %v978, 0.0
  %v987 = vsel %vm57, %v979, 0.0
  %s988 = scalar_lea.vmem %s1, 40
  %v989 = vld [vmem:[%s988] sm:$0xff]
  %v991 = vsel %vm99, %v989, 0
  %v994 = vsel %vm103, %v984, 0
  %v997 = vsel %vm103, %v985, 0
  %v1000 = vsel %vm103, %v986, 0
  %v1003 = vsel %vm103, %v987, 0
  %1005 = vmatprep.subr.mxu0 %v997
  %1006 = vmatpush1.msra.mxu0 %v994
  %1007 = vmatprep.subr.mxu0 0.0
  %1008 = vmatpush1.msra.mxu0 0.0
  %1009 = vmatprep.subr.mxu0 0.0
  %1010 = vmatpush1.msra.mxu0 0.0
  %1011 = vmatprep.subr.mxu0 0.0
  %1012 = vmatpush1.msra.mxu0 0.0
  %1013 = vmatprep.subr.mxu0 0.0
  %1014 = vmatpush1.msra.mxu0 0.0
  %1015 = vmatprep.subr.mxu0 0.0
  %1016 = vmatpush1.msra.mxu0 0.0
  %1017 = vmatprep.subr.mxu0 0.0
  %1018 = vmatpush1.msra.mxu0 0.0
  %1019 = vmatprep.subr.mxu0 0.0
  %1020 = vmatpush1.msra.mxu0 0.0
  %1021 = vmatprep.subr.mxu0 0.0
  %1022 = vmatpush1.msra.mxu0 0.0
  %1023 = vmatprep.subr.mxu0 0.0
  %1024 = vmatpush1.msra.mxu0 0.0
  %1025 = vmatprep.subr.mxu0 0.0
  %1026 = vmatpush1.msra.mxu0 0.0
  %1027 = vmatprep.subr.mxu0 0.0
  %1028 = vmatpush1.msra.mxu0 0.0
  %1029 = vmatprep.subr.mxu0 0.0
  %1030 = vmatpush1.msra.mxu0 0.0
  %1031 = vmatprep.subr.mxu0 0.0
  %1032 = vmatpush1.msra.mxu0 0.0
  %1033 = vmatprep.subr.mxu0 0.0
  %1034 = vmatpush1.msra.mxu0 0.0
  %1035 = vmatprep.subr.mxu0 0.0
  %1036 = vmatpush1.msra.mxu0 0.0
  %1037 = vmatprep.subr.mxu0 0.0
  %1038 = vmatpush1.msra.mxu0 0.0
  %1039 = vmatprep.subr.mxu0 0.0
  %1040 = vmatpush1.msra.mxu0 0.0
  %1041 = vmatprep.subr.mxu0 0.0
  %1042 = vmatpush1.msra.mxu0 0.0
  %1043 = vmatprep.subr.mxu0 0.0
  %1044 = vmatpush1.msra.mxu0 0.0
  %1045 = vmatprep.subr.mxu0 0.0
  %1046 = vmatpush1.msra.mxu0 0.0
  %1047 = vmatprep.subr.mxu0 0.0
  %1048 = vmatpush1.msra.mxu0 0.0
  %1049 = vmatprep.subr.mxu0 0.0
  %1050 = vmatpush1.msra.mxu0 0.0
  %1051 = vmatprep.subr.mxu0 0.0
  %1052 = vmatpush1.msra.mxu0 0.0
  %1053 = vmatprep.subr.mxu0 0.0
  %1054 = vmatpush1.msra.mxu0 0.0
  %1055 = vmatprep.subr.mxu0 0.0
  %1056 = vmatpush1.msra.mxu0 0.0
  %1057 = vmatprep.subr.mxu0 0.0
  %1058 = vmatpush1.msra.mxu0 0.0
  %1059 = vmatprep.subr.mxu0 0.0
  %1060 = vmatpush1.msra.mxu0 0.0
  %1061 = vmatprep.subr.mxu0 0.0
  %1062 = vmatpush1.msra.mxu0 0.0
  %1063 = vmatprep.subr.mxu0 0.0
  %1064 = vmatpush1.msra.mxu0 0.0
  %1065 = vmatprep.subr.mxu0 0.0
  %1066 = vmatpush1.msra.mxu0 0.0
  %1067 = vmatprep.subr.mxu0 0.0
  %1068 = vmatpush1.msra.mxu0 0.0
  %1069 = vmatprep.mubr.f32.mxu0 0.0
  %1070 = vmatmul.mubr.f32.gmra.mrb[0].mxu0 %v991
  %v1071 = vpop.f32.mrb[0].mxu0
  %v1072 = vadd.f32 0.0, %v1071
  %v1073 = vpop.f32.mrb[0].mxu0
  %v1074 = vadd.f32 0.0, %v1073
  %1075 = vdwg.mxu0
  %1076 = vmatprep.subr.mxu0 %v1003
  %1077 = vmatpush1.msra.mxu0 %v1000
  %1078 = vmatprep.subr.mxu0 0.0
  %1079 = vmatpush1.msra.mxu0 0.0
  %1080 = vmatprep.subr.mxu0 0.0
  %1081 = vmatpush1.msra.mxu0 0.0
  %1082 = vmatprep.subr.mxu0 0.0
  %1083 = vmatpush1.msra.mxu0 0.0
  %1084 = vmatprep.subr.mxu0 0.0
  %1085 = vmatpush1.msra.mxu0 0.0
  %1086 = vmatprep.subr.mxu0 0.0
  %1087 = vmatpush1.msra.mxu0 0.0
  %1088 = vmatprep.subr.mxu0 0.0
  %1089 = vmatpush1.msra.mxu0 0.0
  %1090 = vmatprep.subr.mxu0 0.0
  %1091 = vmatpush1.msra.mxu0 0.0
  %1092 = vmatprep.subr.mxu0 0.0
  %1093 = vmatpush1.msra.mxu0 0.0
  %1094 = vmatprep.subr.mxu0 0.0
  %1095 = vmatpush1.msra.mxu0 0.0
  %1096 = vmatprep.subr.mxu0 0.0
  %1097 = vmatpush1.msra.mxu0 0.0
  %1098 = vmatprep.subr.mxu0 0.0
  %1099 = vmatpush1.msra.mxu0 0.0
  %1100 = vmatprep.subr.mxu0 0.0
  %1101 = vmatpush1.msra.mxu0 0.0
  %1102 = vmatprep.subr.mxu0 0.0
  %1103 = vmatpush1.msra.mxu0 0.0
  %1104 = vmatprep.subr.mxu0 0.0
  %1105 = vmatpush1.msra.mxu0 0.0
  %1106 = vmatprep.subr.mxu0 0.0
  %1107 = vmatpush1.msra.mxu0 0.0
  %1108 = vmatprep.subr.mxu0 0.0
  %1109 = vmatpush1.msra.mxu0 0.0
  %1110 = vmatprep.subr.mxu0 0.0
  %1111 = vmatpush1.msra.mxu0 0.0
  %1112 = vmatprep.subr.mxu0 0.0
  %1113 = vmatpush1.msra.mxu0 0.0
  %1114 = vmatprep.subr.mxu0 0.0
  %1115 = vmatpush1.msra.mxu0 0.0
  %1116 = vmatprep.subr.mxu0 0.0
  %1117 = vmatpush1.msra.mxu0 0.0
  %1118 = vmatprep.subr.mxu0 0.0
  %1119 = vmatpush1.msra.mxu0 0.0
  %1120 = vmatprep.subr.mxu0 0.0
  %1121 = vmatpush1.msra.mxu0 0.0
  %1122 = vmatprep.subr.mxu0 0.0
  %1123 = vmatpush1.msra.mxu0 0.0
  %1124 = vmatprep.subr.mxu0 0.0
  %1125 = vmatpush1.msra.mxu0 0.0
  %1126 = vmatprep.subr.mxu0 0.0
  %1127 = vmatpush1.msra.mxu0 0.0
  %1128 = vmatprep.subr.mxu0 0.0
  %1129 = vmatpush1.msra.mxu0 0.0
  %1130 = vmatprep.subr.mxu0 0.0
  %1131 = vmatpush1.msra.mxu0 0.0
  %1132 = vmatprep.subr.mxu0 0.0
  %1133 = vmatpush1.msra.mxu0 0.0
  %1134 = vmatprep.subr.mxu0 0.0
  %1135 = vmatpush1.msra.mxu0 0.0
  %1136 = vmatprep.subr.mxu0 0.0
  %1137 = vmatpush1.msra.mxu0 0.0
  %1138 = vmatprep.subr.mxu0 0.0
  %1139 = vmatpush1.msra.mxu0 0.0
  %1140 = vmatprep.mubr.f32.mxu0 0.0
  %1141 = vmatmul.mubr.f32.gmra.mrb[0].mxu0 %v991
  %v1142 = vpop.f32.mrb[0].mxu0
  %v1143 = vadd.f32 0.0, %v1142
  %v1144 = vpop.f32.mrb[0].mxu0
  %v1145 = vadd.f32 0.0, %v1144
  %1146 = vdwg.mxu0
  %v1147 = vadd.f32 %v961, %v1072
  %v1148 = vadd.f32 %v962, %v1074
  %v1149 = vadd.f32 %v963, %v1143
  %v1150 = vadd.f32 %v964, %v1145
  %vm1151 = vmand %vm46, %vm50
  %vm1152 = vmand %vm47, %vm51
  %vm1153 = vmand %vm48, %vm52
  %vm1154 = vmand %vm49, %vm53
  %1155 = vrot.lane.b32.xlu0 %v22, 96
  %v1156 = vpop.permute.xlu0 %1155
  %1157 = vrot.lane.b32.xlu0 %v64, 96
  %v1158 = vpop.permute.xlu0 %1157
  %1159 = vrot.lane.b32.xlu0 %v23, 96
  %v1160 = vpop.permute.xlu0 %1159
  %1161 = vrot.lane.b32.xlu0 %v65, 96
  %v1162 = vpop.permute.xlu0 %1161
  %1163 = vrot.lane.b32.xlu0 %v24, 96
  %v1164 = vpop.permute.xlu0 %1163
  %vm1165 = vcmask 785408
  %v1166 = vsel %vm1165, %v1156, %v1158
  %v1167 = vsel %vm1165, %v1158, %v1160
  %v1168 = vsel %vm1165, %v1160, %v1162
  %v1169 = vsel %vm1165, %v1162, %v1164
  %v1174 = vsel %vm1151, %v1166, 0.0
  %v1175 = vsel %vm1152, %v1167, 0.0
  %v1176 = vsel %vm1153, %v1168, 0.0
  %v1177 = vsel %vm1154, %v1169, 0.0
  %s1178 = scalar_lea.vmem %s1, 48
  %v1179 = vld [vmem:[%s1178] sm:$0xff]
  %v1181 = vsel %vm99, %v1179, 0
  %v1184 = vsel %vm103, %v1174, 0
  %v1187 = vsel %vm103, %v1175, 0
  %v1190 = vsel %vm103, %v1176, 0
  %v1193 = vsel %vm103, %v1177, 0
  %1195 = vmatprep.subr.mxu0 %v1187
  %1196 = vmatpush1.msra.mxu0 %v1184
  %1197 = vmatprep.subr.mxu0 0.0
  %1198 = vmatpush1.msra.mxu0 0.0
  %1199 = vmatprep.subr.mxu0 0.0
  %1200 = vmatpush1.msra.mxu0 0.0
  %1201 = vmatprep.subr.mxu0 0.0
  %1202 = vmatpush1.msra.mxu0 0.0
  %1203 = vmatprep.subr.mxu0 0.0
  %1204 = vmatpush1.msra.mxu0 0.0
  %1205 = vmatprep.subr.mxu0 0.0
  %1206 = vmatpush1.msra.mxu0 0.0
  %1207 = vmatprep.subr.mxu0 0.0
  %1208 = vmatpush1.msra.mxu0 0.0
  %1209 = vmatprep.subr.mxu0 0.0
  %1210 = vmatpush1.msra.mxu0 0.0
  %1211 = vmatprep.subr.mxu0 0.0
  %1212 = vmatpush1.msra.mxu0 0.0
  %1213 = vmatprep.subr.mxu0 0.0
  %1214 = vmatpush1.msra.mxu0 0.0
  %1215 = vmatprep.subr.mxu0 0.0
  %1216 = vmatpush1.msra.mxu0 0.0
  %1217 = vmatprep.subr.mxu0 0.0
  %1218 = vmatpush1.msra.mxu0 0.0
  %1219 = vmatprep.subr.mxu0 0.0
  %1220 = vmatpush1.msra.mxu0 0.0
  %1221 = vmatprep.subr.mxu0 0.0
  %1222 = vmatpush1.msra.mxu0 0.0
  %1223 = vmatprep.subr.mxu0 0.0
  %1224 = vmatpush1.msra.mxu0 0.0
  %1225 = vmatprep.subr.mxu0 0.0
  %1226 = vmatpush1.msra.mxu0 0.0
  %1227 = vmatprep.subr.mxu0 0.0
  %1228 = vmatpush1.msra.mxu0 0.0
  %1229 = vmatprep.subr.mxu0 0.0
  %1230 = vmatpush1.msra.mxu0 0.0
  %1231 = vmatprep.subr.mxu0 0.0
  %1232 = vmatpush1.msra.mxu0 0.0
  %1233 = vmatprep.subr.mxu0 0.0
  %1234 = vmatpush1.msra.mxu0 0.0
  %1235 = vmatprep.subr.mxu0 0.0
  %1236 = vmatpush1.msra.mxu0 0.0
  %1237 = vmatprep.subr.mxu0 0.0
  %1238 = vmatpush1.msra.mxu0 0.0
  %1239 = vmatprep.subr.mxu0 0.0
  %1240 = vmatpush1.msra.mxu0 0.0
  %1241 = vmatprep.subr.mxu0 0.0
  %1242 = vmatpush1.msra.mxu0 0.0
  %1243 = vmatprep.subr.mxu0 0.0
  %1244 = vmatpush1.msra.mxu0 0.0
  %1245 = vmatprep.subr.mxu0 0.0
  %1246 = vmatpush1.msra.mxu0 0.0
  %1247 = vmatprep.subr.mxu0 0.0
  %1248 = vmatpush1.msra.mxu0 0.0
  %1249 = vmatprep.subr.mxu0 0.0
  %1250 = vmatpush1.msra.mxu0 0.0
  %1251 = vmatprep.subr.mxu0 0.0
  %1252 = vmatpush1.msra.mxu0 0.0
  %1253 = vmatprep.subr.mxu0 0.0
  %1254 = vmatpush1.msra.mxu0 0.0
  %1255 = vmatprep.subr.mxu0 0.0
  %1256 = vmatpush1.msra.mxu0 0.0
  %1257 = vmatprep.subr.mxu0 0.0
  %1258 = vmatpush1.msra.mxu0 0.0
  %1259 = vmatprep.mubr.f32.mxu0 0.0
  %1260 = vmatmul.mubr.f32.gmra.mrb[0].mxu0 %v1181
  %v1261 = vpop.f32.mrb[0].mxu0
  %v1262 = vadd.f32 0.0, %v1261
  %v1263 = vpop.f32.mrb[0].mxu0
  %v1264 = vadd.f32 0.0, %v1263
  %1265 = vdwg.mxu0
  %1266 = vmatprep.subr.mxu0 %v1193
  %1267 = vmatpush1.msra.mxu0 %v1190
  %1268 = vmatprep.subr.mxu0 0.0
  %1269 = vmatpush1.msra.mxu0 0.0
  %1270 = vmatprep.subr.mxu0 0.0
  %1271 = vmatpush1.msra.mxu0 0.0
  %1272 = vmatprep.subr.mxu0 0.0
  %1273 = vmatpush1.msra.mxu0 0.0
  %1274 = vmatprep.subr.mxu0 0.0
  %1275 = vmatpush1.msra.mxu0 0.0
  %1276 = vmatprep.subr.mxu0 0.0
  %1277 = vmatpush1.msra.mxu0 0.0
  %1278 = vmatprep.subr.mxu0 0.0
  %1279 = vmatpush1.msra.mxu0 0.0
  %1280 = vmatprep.subr.mxu0 0.0
  %1281 = vmatpush1.msra.mxu0 0.0
  %1282 = vmatprep.subr.mxu0 0.0
  %1283 = vmatpush1.msra.mxu0 0.0
  %1284 = vmatprep.subr.mxu0 0.0
  %1285 = vmatpush1.msra.mxu0 0.0
  %1286 = vmatprep.subr.mxu0 0.0
  %1287 = vmatpush1.msra.mxu0 0.0
  %1288 = vmatprep.subr.mxu0 0.0
  %1289 = vmatpush1.msra.mxu0 0.0
  %1290 = vmatprep.subr.mxu0 0.0
  %1291 = vmatpush1.msra.mxu0 0.0
  %1292 = vmatprep.subr.mxu0 0.0
  %1293 = vmatpush1.msra.mxu0 0.0
  %1294 = vmatprep.subr.mxu0 0.0
  %1295 = vmatpush1.msra.mxu0 0.0
  %1296 = vmatprep.subr.mxu0 0.0
  %1297 = vmatpush1.msra.mxu0 0.0
  %1298 = vmatprep.subr.mxu0 0.0
  %1299 = vmatpush1.msra.mxu0 0.0
  %1300 = vmatprep.subr.mxu0 0.0
  %1301 = vmatpush1.msra.mxu0 0.0
  %1302 = vmatprep.subr.mxu0 0.0
  %1303 = vmatpush1.msra.mxu0 0.0
  %1304 = vmatprep.subr.mxu0 0.0
  %1305 = vmatpush1.msra.mxu0 0.0
  %1306 = vmatprep.subr.mxu0 0.0
  %1307 = vmatpush1.msra.mxu0 0.0
  %1308 = vmatprep.subr.mxu0 0.0
  %1309 = vmatpush1.msra.mxu0 0.0
  %1310 = vmatprep.subr.mxu0 0.0
  %1311 = vmatpush1.msra.mxu0 0.0
  %1312 = vmatprep.subr.mxu0 0.0
  %1313 = vmatpush1.msra.mxu0 0.0
  %1314 = vmatprep.subr.mxu0 0.0
  %1315 = vmatpush1.msra.mxu0 0.0
  %1316 = vmatprep.subr.mxu0 0.0
  %1317 = vmatpush1.msra.mxu0 0.0
  %1318 = vmatprep.subr.mxu0 0.0
  %1319 = vmatpush1.msra.mxu0 0.0
  %1320 = vmatprep.subr.mxu0 0.0
  %1321 = vmatpush1.msra.mxu0 0.0
  %1322 = vmatprep.subr.mxu0 0.0
  %1323 = vmatpush1.msra.mxu0 0.0
  %1324 = vmatprep.subr.mxu0 0.0
  %1325 = vmatpush1.msra.mxu0 0.0
  %1326 = vmatprep.subr.mxu0 0.0
  %1327 = vmatpush1.msra.mxu0 0.0
  %1328 = vmatprep.subr.mxu0 0.0
  %1329 = vmatpush1.msra.mxu0 0.0
  %1330 = vmatprep.mubr.f32.mxu0 0.0
  %1331 = vmatmul.mubr.f32.gmra.mrb[0].mxu0 %v1181
  %v1332 = vpop.f32.mrb[0].mxu0
  %v1333 = vadd.f32 0.0, %v1332
  %v1334 = vpop.f32.mrb[0].mxu0
  %v1335 = vadd.f32 0.0, %v1334
  %1336 = vdwg.mxu0
  %v1337 = vadd.f32 %v1147, %v1262
  %v1338 = vadd.f32 %v1148, %v1264
  %v1339 = vadd.f32 %v1149, %v1333
  %v1340 = vadd.f32 %v1150, %v1335
  %1341 = vrot.lane.b32.xlu0 %v22, 95
  %v1342 = vpop.permute.xlu0 %1341
  %1343 = vrot.lane.b32.xlu0 %v64, 95
  %v1344 = vpop.permute.xlu0 %1343
  %1345 = vrot.lane.b32.xlu0 %v23, 95
  %v1346 = vpop.permute.xlu0 %1345
  %1347 = vrot.lane.b32.xlu0 %v65, 95
  %v1348 = vpop.permute.xlu0 %1347
  %1349 = vrot.lane.b32.xlu0 %v24, 95
  %v1350 = vpop.permute.xlu0 %1349
  %vm1351 = vcmask 777216
  %v1352 = vsel %vm1351, %v1342, %v1344
  %v1353 = vsel %vm1351, %v1344, %v1346
  %v1354 = vsel %vm1351, %v1346, %v1348
  %v1355 = vsel %vm1351, %v1348, %v1350
  %v1360 = vsel %vm46, %v1352, 0.0
  %v1361 = vsel %vm47, %v1353, 0.0
  %v1362 = vsel %vm48, %v1354, 0.0
  %v1363 = vsel %vm49, %v1355, 0.0
  %s1364 = scalar_lea.vmem %s1, 56
  %v1365 = vld [vmem:[%s1364] sm:$0xff]
  %v1367 = vsel %vm99, %v1365, 0
  %v1370 = vsel %vm103, %v1360, 0
  %v1373 = vsel %vm103, %v1361, 0
  %v1376 = vsel %vm103, %v1362, 0
  %v1379 = vsel %vm103, %v1363, 0
  %1381 = vmatprep.subr.mxu0 %v1373
  %1382 = vmatpush1.msra.mxu0 %v1370
  %1383 = vmatprep.subr.mxu0 0.0
  %1384 = vmatpush1.msra.mxu0 0.0
  %1385 = vmatprep.subr.mxu0 0.0
  %1386 = vmatpush1.msra.mxu0 0.0
  %1387 = vmatprep.subr.mxu0 0.0
  %1388 = vmatpush1.msra.mxu0 0.0
  %1389 = vmatprep.subr.mxu0 0.0
  %1390 = vmatpush1.msra.mxu0 0.0
  %1391 = vmatprep.subr.mxu0 0.0
  %1392 = vmatpush1.msra.mxu0 0.0
  %1393 = vmatprep.subr.mxu0 0.0
  %1394 = vmatpush1.msra.mxu0 0.0
  %1395 = vmatprep.subr.mxu0 0.0
  %1396 = vmatpush1.msra.mxu0 0.0
  %1397 = vmatprep.subr.mxu0 0.0
  %1398 = vmatpush1.msra.mxu0 0.0
  %1399 = vmatprep.subr.mxu0 0.0
  %1400 = vmatpush1.msra.mxu0 0.0
  %1401 = vmatprep.subr.mxu0 0.0
  %1402 = vmatpush1.msra.mxu0 0.0
  %1403 = vmatprep.subr.mxu0 0.0
  %1404 = vmatpush1.msra.mxu0 0.0
  %1405 = vmatprep.subr.mxu0 0.0
  %1406 = vmatpush1.msra.mxu0 0.0
  %1407 = vmatprep.subr.mxu0 0.0
  %1408 = vmatpush1.msra.mxu0 0.0
  %1409 = vmatprep.subr.mxu0 0.0
  %1410 = vmatpush1.msra.mxu0 0.0
  %1411 = vmatprep.subr.mxu0 0.0
  %1412 = vmatpush1.msra.mxu0 0.0
  %1413 = vmatprep.subr.mxu0 0.0
  %1414 = vmatpush1.msra.mxu0 0.0
  %1415 = vmatprep.subr.mxu0 0.0
  %1416 = vmatpush1.msra.mxu0 0.0
  %1417 = vmatprep.subr.mxu0 0.0
  %1418 = vmatpush1.msra.mxu0 0.0
  %1419 = vmatprep.subr.mxu0 0.0
  %1420 = vmatpush1.msra.mxu0 0.0
  %1421 = vmatprep.subr.mxu0 0.0
  %1422 = vmatpush1.msra.mxu0 0.0
  %1423 = vmatprep.subr.mxu0 0.0
  %1424 = vmatpush1.msra.mxu0 0.0
  %1425 = vmatprep.subr.mxu0 0.0
  %1426 = vmatpush1.msra.mxu0 0.0
  %1427 = vmatprep.subr.mxu0 0.0
  %1428 = vmatpush1.msra.mxu0 0.0
  %1429 = vmatprep.subr.mxu0 0.0
  %1430 = vmatpush1.msra.mxu0 0.0
  %1431 = vmatprep.subr.mxu0 0.0
  %1432 = vmatpush1.msra.mxu0 0.0
  %1433 = vmatprep.subr.mxu0 0.0
  %1434 = vmatpush1.msra.mxu0 0.0
  %1435 = vmatprep.subr.mxu0 0.0
  %1436 = vmatpush1.msra.mxu0 0.0
  %1437 = vmatprep.subr.mxu0 0.0
  %1438 = vmatpush1.msra.mxu0 0.0
  %1439 = vmatprep.subr.mxu0 0.0
  %1440 = vmatpush1.msra.mxu0 0.0
  %1441 = vmatprep.subr.mxu0 0.0
  %1442 = vmatpush1.msra.mxu0 0.0
  %1443 = vmatprep.subr.mxu0 0.0
  %1444 = vmatpush1.msra.mxu0 0.0
  %1445 = vmatprep.mubr.f32.mxu0 0.0
  %1446 = vmatmul.mubr.f32.gmra.mrb[0].mxu0 %v1367
  %v1447 = vpop.f32.mrb[0].mxu0
  %v1448 = vadd.f32 0.0, %v1447
  %v1449 = vpop.f32.mrb[0].mxu0
  %v1450 = vadd.f32 0.0, %v1449
  %1451 = vdwg.mxu0
  %1452 = vmatprep.subr.mxu0 %v1379
  %1453 = vmatpush1.msra.mxu0 %v1376
  %1454 = vmatprep.subr.mxu0 0.0
  %1455 = vmatpush1.msra.mxu0 0.0
  %1456 = vmatprep.subr.mxu0 0.0
  %1457 = vmatpush1.msra.mxu0 0.0
  %1458 = vmatprep.subr.mxu0 0.0
  %1459 = vmatpush1.msra.mxu0 0.0
  %1460 = vmatprep.subr.mxu0 0.0
  %1461 = vmatpush1.msra.mxu0 0.0
  %1462 = vmatprep.subr.mxu0 0.0
  %1463 = vmatpush1.msra.mxu0 0.0
  %1464 = vmatprep.subr.mxu0 0.0
  %1465 = vmatpush1.msra.mxu0 0.0
  %1466 = vmatprep.subr.mxu0 0.0
  %1467 = vmatpush1.msra.mxu0 0.0
  %1468 = vmatprep.subr.mxu0 0.0
  %1469 = vmatpush1.msra.mxu0 0.0
  %1470 = vmatprep.subr.mxu0 0.0
  %1471 = vmatpush1.msra.mxu0 0.0
  %1472 = vmatprep.subr.mxu0 0.0
  %1473 = vmatpush1.msra.mxu0 0.0
  %1474 = vmatprep.subr.mxu0 0.0
  %1475 = vmatpush1.msra.mxu0 0.0
  %1476 = vmatprep.subr.mxu0 0.0
  %1477 = vmatpush1.msra.mxu0 0.0
  %1478 = vmatprep.subr.mxu0 0.0
  %1479 = vmatpush1.msra.mxu0 0.0
  %1480 = vmatprep.subr.mxu0 0.0
  %1481 = vmatpush1.msra.mxu0 0.0
  %1482 = vmatprep.subr.mxu0 0.0
  %1483 = vmatpush1.msra.mxu0 0.0
  %1484 = vmatprep.subr.mxu0 0.0
  %1485 = vmatpush1.msra.mxu0 0.0
  %1486 = vmatprep.subr.mxu0 0.0
  %1487 = vmatpush1.msra.mxu0 0.0
  %1488 = vmatprep.subr.mxu0 0.0
  %1489 = vmatpush1.msra.mxu0 0.0
  %1490 = vmatprep.subr.mxu0 0.0
  %1491 = vmatpush1.msra.mxu0 0.0
  %1492 = vmatprep.subr.mxu0 0.0
  %1493 = vmatpush1.msra.mxu0 0.0
  %1494 = vmatprep.subr.mxu0 0.0
  %1495 = vmatpush1.msra.mxu0 0.0
  %1496 = vmatprep.subr.mxu0 0.0
  %1497 = vmatpush1.msra.mxu0 0.0
  %1498 = vmatprep.subr.mxu0 0.0
  %1499 = vmatpush1.msra.mxu0 0.0
  %1500 = vmatprep.subr.mxu0 0.0
  %1501 = vmatpush1.msra.mxu0 0.0
  %1502 = vmatprep.subr.mxu0 0.0
  %1503 = vmatpush1.msra.mxu0 0.0
  %1504 = vmatprep.subr.mxu0 0.0
  %1505 = vmatpush1.msra.mxu0 0.0
  %1506 = vmatprep.subr.mxu0 0.0
  %1507 = vmatpush1.msra.mxu0 0.0
  %1508 = vmatprep.subr.mxu0 0.0
  %1509 = vmatpush1.msra.mxu0 0.0
  %1510 = vmatprep.subr.mxu0 0.0
  %1511 = vmatpush1.msra.mxu0 0.0
  %1512 = vmatprep.subr.mxu0 0.0
  %1513 = vmatpush1.msra.mxu0 0.0
  %1514 = vmatprep.subr.mxu0 0.0
  %1515 = vmatpush1.msra.mxu0 0.0
  %1516 = vmatprep.mubr.f32.mxu0 0.0
  %1517 = vmatmul.mubr.f32.gmra.mrb[0].mxu0 %v1367
  %v1518 = vpop.f32.mrb[0].mxu0
  %v1519 = vadd.f32 0.0, %v1518
  %v1520 = vpop.f32.mrb[0].mxu0
  %v1521 = vadd.f32 0.0, %v1520
  %1522 = vdwg.mxu0
  %v1523 = vadd.f32 %v1337, %v1448
  %v1524 = vadd.f32 %v1338, %v1450
  %v1525 = vadd.f32 %v1339, %v1519
  %v1526 = vadd.f32 %v1340, %v1521
  %vm1527 = vmand %vm46, %vm54
  %vm1528 = vmand %vm47, %vm55
  %vm1529 = vmand %vm48, %vm56
  %vm1530 = vmand %vm49, %vm57
  %1531 = vrot.lane.b32.xlu0 %v22, 94
  %v1532 = vpop.permute.xlu0 %1531
  %1533 = vrot.lane.b32.xlu0 %v64, 94
  %v1534 = vpop.permute.xlu0 %1533
  %1535 = vrot.lane.b32.xlu0 %v23, 94
  %v1536 = vpop.permute.xlu0 %1535
  %1537 = vrot.lane.b32.xlu0 %v65, 94
  %v1538 = vpop.permute.xlu0 %1537
  %1539 = vrot.lane.b32.xlu0 %v24, 94
  %v1540 = vpop.permute.xlu0 %1539
  %vm1541 = vcmask 769024
  %v1542 = vsel %vm1541, %v1532, %v1534
  %v1543 = vsel %vm1541, %v1534, %v1536
  %v1544 = vsel %vm1541, %v1536, %v1538
  %v1545 = vsel %vm1541, %v1538, %v1540
  %v1550 = vsel %vm1527, %v1542, 0.0
  %v1551 = vsel %vm1528, %v1543, 0.0
  %v1552 = vsel %vm1529, %v1544, 0.0
  %v1553 = vsel %vm1530, %v1545, 0.0
  %s1554 = scalar_lea.vmem %s1, 64
  %v1555 = vld [vmem:[%s1554] sm:$0xff]
  %v1557 = vsel %vm99, %v1555, 0
  %v1560 = vsel %vm103, %v1550, 0
  %v1563 = vsel %vm103, %v1551, 0
  %v1566 = vsel %vm103, %v1552, 0
  %v1569 = vsel %vm103, %v1553, 0
  %1571 = vmatprep.subr.mxu0 %v1563
  %1572 = vmatpush1.msra.mxu0 %v1560
  %1573 = vmatprep.subr.mxu0 0.0
  %1574 = vmatpush1.msra.mxu0 0.0
  %1575 = vmatprep.subr.mxu0 0.0
  %1576 = vmatpush1.msra.mxu0 0.0
  %1577 = vmatprep.subr.mxu0 0.0
  %1578 = vmatpush1.msra.mxu0 0.0
  %1579 = vmatprep.subr.mxu0 0.0
  %1580 = vmatpush1.msra.mxu0 0.0
  %1581 = vmatprep.subr.mxu0 0.0
  %1582 = vmatpush1.msra.mxu0 0.0
  %1583 = vmatprep.subr.mxu0 0.0
  %1584 = vmatpush1.msra.mxu0 0.0
  %1585 = vmatprep.subr.mxu0 0.0
  %1586 = vmatpush1.msra.mxu0 0.0
  %1587 = vmatprep.subr.mxu0 0.0
  %1588 = vmatpush1.msra.mxu0 0.0
  %1589 = vmatprep.subr.mxu0 0.0
  %1590 = vmatpush1.msra.mxu0 0.0
  %1591 = vmatprep.subr.mxu0 0.0
  %1592 = vmatpush1.msra.mxu0 0.0
  %1593 = vmatprep.subr.mxu0 0.0
  %1594 = vmatpush1.msra.mxu0 0.0
  %1595 = vmatprep.subr.mxu0 0.0
  %1596 = vmatpush1.msra.mxu0 0.0
  %1597 = vmatprep.subr.mxu0 0.0
  %1598 = vmatpush1.msra.mxu0 0.0
  %1599 = vmatprep.subr.mxu0 0.0
  %1600 = vmatpush1.msra.mxu0 0.0
  %1601 = vmatprep.subr.mxu0 0.0
  %1602 = vmatpush1.msra.mxu0 0.0
  %1603 = vmatprep.subr.mxu0 0.0
  %1604 = vmatpush1.msra.mxu0 0.0
  %1605 = vmatprep.subr.mxu0 0.0
  %1606 = vmatpush1.msra.mxu0 0.0
  %1607 = vmatprep.subr.mxu0 0.0
  %1608 = vmatpush1.msra.mxu0 0.0
  %1609 = vmatprep.subr.mxu0 0.0
  %1610 = vmatpush1.msra.mxu0 0.0
  %1611 = vmatprep.subr.mxu0 0.0
  %1612 = vmatpush1.msra.mxu0 0.0
  %1613 = vmatprep.subr.mxu0 0.0
  %1614 = vmatpush1.msra.mxu0 0.0
  %1615 = vmatprep.subr.mxu0 0.0
  %1616 = vmatpush1.msra.mxu0 0.0
  %1617 = vmatprep.subr.mxu0 0.0
  %1618 = vmatpush1.msra.mxu0 0.0
  %1619 = vmatprep.subr.mxu0 0.0
  %1620 = vmatpush1.msra.mxu0 0.0
  %1621 = vmatprep.subr.mxu0 0.0
  %1622 = vmatpush1.msra.mxu0 0.0
  %1623 = vmatprep.subr.mxu0 0.0
  %1624 = vmatpush1.msra.mxu0 0.0
  %1625 = vmatprep.subr.mxu0 0.0
  %1626 = vmatpush1.msra.mxu0 0.0
  %1627 = vmatprep.subr.mxu0 0.0
  %1628 = vmatpush1.msra.mxu0 0.0
  %1629 = vmatprep.subr.mxu0 0.0
  %1630 = vmatpush1.msra.mxu0 0.0
  %1631 = vmatprep.subr.mxu0 0.0
  %1632 = vmatpush1.msra.mxu0 0.0
  %1633 = vmatprep.subr.mxu0 0.0
  %1634 = vmatpush1.msra.mxu0 0.0
  %1635 = vmatprep.mubr.f32.mxu0 0.0
  %1636 = vmatmul.mubr.f32.gmra.mrb[0].mxu0 %v1557
  %v1637 = vpop.f32.mrb[0].mxu0
  %v1638 = vadd.f32 0.0, %v1637
  %v1639 = vpop.f32.mrb[0].mxu0
  %v1640 = vadd.f32 0.0, %v1639
  %1641 = vdwg.mxu0
  %1642 = vmatprep.subr.mxu0 %v1569
  %1643 = vmatpush1.msra.mxu0 %v1566
  %1644 = vmatprep.subr.mxu0 0.0
  %1645 = vmatpush1.msra.mxu0 0.0
  %1646 = vmatprep.subr.mxu0 0.0
  %1647 = vmatpush1.msra.mxu0 0.0
  %1648 = vmatprep.subr.mxu0 0.0
  %1649 = vmatpush1.msra.mxu0 0.0
  %1650 = vmatprep.subr.mxu0 0.0
  %1651 = vmatpush1.msra.mxu0 0.0
  %1652 = vmatprep.subr.mxu0 0.0
  %1653 = vmatpush1.msra.mxu0 0.0
  %1654 = vmatprep.subr.mxu0 0.0
  %1655 = vmatpush1.msra.mxu0 0.0
  %1656 = vmatprep.subr.mxu0 0.0
  %1657 = vmatpush1.msra.mxu0 0.0
  %1658 = vmatprep.subr.mxu0 0.0
  %1659 = vmatpush1.msra.mxu0 0.0
  %1660 = vmatprep.subr.mxu0 0.0
  %1661 = vmatpush1.msra.mxu0 0.0
  %1662 = vmatprep.subr.mxu0 0.0
  %1663 = vmatpush1.msra.mxu0 0.0
  %1664 = vmatprep.subr.mxu0 0.0
  %1665 = vmatpush1.msra.mxu0 0.0
  %1666 = vmatprep.subr.mxu0 0.0
  %1667 = vmatpush1.msra.mxu0 0.0
  %1668 = vmatprep.subr.mxu0 0.0
  %1669 = vmatpush1.msra.mxu0 0.0
  %1670 = vmatprep.subr.mxu0 0.0
  %1671 = vmatpush1.msra.mxu0 0.0
  %1672 = vmatprep.subr.mxu0 0.0
  %1673 = vmatpush1.msra.mxu0 0.0
  %1674 = vmatprep.subr.mxu0 0.0
  %1675 = vmatpush1.msra.mxu0 0.0
  %1676 = vmatprep.subr.mxu0 0.0
  %1677 = vmatpush1.msra.mxu0 0.0
  %1678 = vmatprep.subr.mxu0 0.0
  %1679 = vmatpush1.msra.mxu0 0.0
  %1680 = vmatprep.subr.mxu0 0.0
  %1681 = vmatpush1.msra.mxu0 0.0
  %1682 = vmatprep.subr.mxu0 0.0
  %1683 = vmatpush1.msra.mxu0 0.0
  %1684 = vmatprep.subr.mxu0 0.0
  %1685 = vmatpush1.msra.mxu0 0.0
  %1686 = vmatprep.subr.mxu0 0.0
  %1687 = vmatpush1.msra.mxu0 0.0
  %1688 = vmatprep.subr.mxu0 0.0
  %1689 = vmatpush1.msra.mxu0 0.0
  %1690 = vmatprep.subr.mxu0 0.0
  %1691 = vmatpush1.msra.mxu0 0.0
  %1692 = vmatprep.subr.mxu0 0.0
  %1693 = vmatpush1.msra.mxu0 0.0
  %1694 = vmatprep.subr.mxu0 0.0
  %1695 = vmatpush1.msra.mxu0 0.0
  %1696 = vmatprep.subr.mxu0 0.0
  %1697 = vmatpush1.msra.mxu0 0.0
  %1698 = vmatprep.subr.mxu0 0.0
  %1699 = vmatpush1.msra.mxu0 0.0
  %1700 = vmatprep.subr.mxu0 0.0
  %1701 = vmatpush1.msra.mxu0 0.0
  %1702 = vmatprep.subr.mxu0 0.0
  %1703 = vmatpush1.msra.mxu0 0.0
  %1704 = vmatprep.subr.mxu0 0.0
  %1705 = vmatpush1.msra.mxu0 0.0
  %1706 = vmatprep.mubr.f32.mxu0 0.0
  %1707 = vmatmul.mubr.f32.gmra.mrb[0].mxu0 %v1557
  %v1708 = vpop.f32.mrb[0].mxu0
  %v1709 = vadd.f32 0.0, %v1708
  %v1710 = vpop.f32.mrb[0].mxu0
  %v1711 = vadd.f32 0.0, %v1710
  %1712 = vdwg.mxu0
  %v1713 = vadd.f32 %v1523, %v1638
  %v1714 = vadd.f32 %v1524, %v1640
  %v1715 = vadd.f32 %v1525, %v1709
  %v1716 = vadd.f32 %v1526, %v1711
  %v1717 = vld [vmem:[%s2] sm:$0xff]
  %1719 = vset.pattern.permute.xlu0 0
  %1720 = vperm.xlu0 %1719, %v1717
  %v1721 = vpop.permute.xlu0 %1720
  %v1723 = vadd.f32 %v1713, %v1721
  %v1724 = vadd.f32 %v1714, %v1721
  %v1725 = vadd.f32 %v1715, %v1721
  %v1726 = vadd.f32 %v1716, %v1721
  %v1727 = vmax.f32 %v1723, 0.0
  %v1728 = vmax.f32 %v1724, 0.0
  %v1729 = vmax.f32 %v1725, 0.0
  %v1730 = vmax.f32 %v1726, 0.0
  %v1731 = vld [vmem:[%s3] sm:$0xff]
  %v1732 = vld [vmem:[%s4] sm:$0x1]
  %v1733 = vlaneseq
  %v1734 = vshrl.u32 %v1733, 7
  %v1735 = vadd.f32 %v1727, %v1728
  %1736 = vadd.xlane.f32.xlu0 %v1735
  %v1737 = vpop.xlane.xlu0 %1736
  %v1738 = vmul.f32 %v1737, 0.00390625
  %v1739 = vmul.f32 %v1738, %v1731
  %v1740 = vrot.slane %v1739, 4
  %v1741 = vadd.f32 %v1739, %v1740
  %v1742 = vrot.slane %v1741, 2
  %v1743 = vadd.f32 %v1741, %v1742
  %v1744 = vrot.slane %v1743, 1
  %v1745 = vadd.f32 %v1743, %v1744
  %v1746 = vadd.f32 %v1745, %v1732
  %vm1747 = vcmp.eq.s32.totalorder %v1734, 0
  %v1748 = vxor.u32 %v1746, 2147483648
  %v1749 = vmul.f32 %v1748, 1.442695
  %v1750 = vpow.pop %v1749
  %v1751 = vadd.f32 %v1750, 1.0
  %v1752 = vrcp.pop %v1751
  %v1753 = vmul.f32 1.0, %v1752
  %v1754 = vlaneseq
  %v1755 = vshrl.u32 %v1754, 7
  %v1756 = vsub.s32 0, %v1755
  %v1757 = vrot.slane %v1753, %v1756
  %v1758 = vsel %vm1747, %v1757, 0.0
  %v1759 = vadd.f32 %v1729, %v1730
  %1760 = vadd.xlane.f32.xlu0 %v1759
  %v1761 = vpop.xlane.xlu0 %1760
  %v1762 = vmul.f32 %v1761, 0.00390625
  %v1763 = vmul.f32 %v1762, %v1731
  %v1764 = vrot.slane %v1763, 4
  %v1765 = vadd.f32 %v1763, %v1764
  %v1766 = vrot.slane %v1765, 2
  %v1767 = vadd.f32 %v1765, %v1766
  %v1768 = vrot.slane %v1767, 1
  %v1769 = vadd.f32 %v1767, %v1768
  %v1770 = vadd.f32 %v1769, %v1732
  %vm1771 = vcmp.eq.s32.totalorder %v1734, 1
  %v1772 = vxor.u32 %v1770, 2147483648
  %v1773 = vmul.f32 %v1772, 1.442695
  %v1774 = vpow.pop %v1773
  %v1775 = vadd.f32 %v1774, 1.0
  %v1776 = vrcp.pop %v1775
  %v1777 = vmul.f32 1.0, %v1776
  %v1778 = vlaneseq
  %v1779 = vshrl.u32 %v1778, 7
  %v1780 = vsub.s32 0, %v1779
  %v1781 = vrot.slane %v1777, %v1780
  %v1782 = vsel %vm1771, %v1781, %v1758
  %1783 = vst [vmem:[%s5] sm:$0xff] %v1782
  %v1785 = vand.u32 %v1782, 4294967264
  %v1786 = vsub.s32 31, %v26
  %v1787 = vor.u32 %v1785, %v1786
  %vm1789 = vcmp.lt.s32.totalorder %v26, 32
  %v1790 = vsel %vm1789, %v1787, -1.0
  %v1791 = vmul.f32 %v1782, 2.0
  %v1792 = vcvt.f32.s32.to.zero.pseudo %v1791
  %vm1793 = vcmp.ne.s32.totalorder %v1792, 0
  %vm1794 = vmand %vm1789, %vm1793
  %v1795 = vsel %vm1794, 1.0, 0.0
  %1796 = vadd.xlane.f32.xlu0 %v1795
  %v1797 = vpop.xlane.xlu0 %1796
  %1798 = vmax.xlane.f32.xlu0 %v1790
  %v1799 = vpop.xlane.xlu0 %1798
  %v1801 = vand.u32 %v1799, 31
  %v1802 = vsub.s32 31, %v1801
  %vm1803 = vcmp.lt.f32.partialorder 0.0, %v1797
  %v1804 = vsel %vm1803, %v1802, 2
  %vm1805 = vcmp.eq.s32.totalorder %v26, 0
  %v1806 = vsel %vm1805, %v1804, 2
  %vm1807 = vcmp.eq.s32.totalorder %v26, %v1802
  %v1808 = vsel %vm1807, -1.0, %v1790
  %1809 = vmax.xlane.f32.xlu0 %v1808
  %v1810 = vpop.xlane.xlu0 %1809
  %v1812 = vand.u32 %v1810, 31
  %v1813 = vsub.s32 31, %v1812
  %vm1814 = vcmp.lt.f32.partialorder 1.0, %v1797
  %v1815 = vsel %vm1814, %v1813, 2
  %vm1816 = vcmp.eq.s32.totalorder %v26, 1
  %v1817 = vsel %vm1816, %v1815, %v1806
  %vm1818 = vcmp.eq.s32.totalorder %v26, %v1813
  %v1819 = vsel %vm1818, -1.0, %v1808
  %1820 = vmax.xlane.f32.xlu0 %v1819
  %v1821 = vpop.xlane.xlu0 %1820
  %v1823 = vand.u32 %v1821, 31
  %v1824 = vsub.s32 31, %v1823
  %vm1825 = vcmp.lt.f32.partialorder 2.0, %v1797
  %v1826 = vsel %vm1825, %v1824, 2
  %vm1827 = vcmp.eq.s32.totalorder %v26, 2
  %v1828 = vsel %vm1827, %v1826, %v1817
  %vm1829 = vcmp.eq.s32.totalorder %v26, %v1824
  %v1830 = vsel %vm1829, -1.0, %v1819
  %1831 = vmax.xlane.f32.xlu0 %v1830
  %v1832 = vpop.xlane.xlu0 %1831
  %v1834 = vand.u32 %v1832, 31
  %v1835 = vsub.s32 31, %v1834
  %vm1836 = vcmp.lt.f32.partialorder 3.0, %v1797
  %v1837 = vsel %vm1836, %v1835, 2
  %vm1838 = vcmp.eq.s32.totalorder %v26, 3
  %v1839 = vsel %vm1838, %v1837, %v1828
  %vm1840 = vcmp.eq.s32.totalorder %v26, %v1835
  %v1841 = vsel %vm1840, -1.0, %v1830
  %1842 = vmax.xlane.f32.xlu0 %v1841
  %v1843 = vpop.xlane.xlu0 %1842
  %v1845 = vand.u32 %v1843, 31
  %v1846 = vsub.s32 31, %v1845
  %vm1847 = vcmp.lt.f32.partialorder 4.0, %v1797
  %v1848 = vsel %vm1847, %v1846, 2
  %vm1849 = vcmp.eq.s32.totalorder %v26, 4
  %v1850 = vsel %vm1849, %v1848, %v1839
  %vm1851 = vcmp.eq.s32.totalorder %v26, %v1846
  %v1852 = vsel %vm1851, -1.0, %v1841
  %1853 = vmax.xlane.f32.xlu0 %v1852
  %v1854 = vpop.xlane.xlu0 %1853
  %v1856 = vand.u32 %v1854, 31
  %v1857 = vsub.s32 31, %v1856
  %vm1858 = vcmp.lt.f32.partialorder 5.0, %v1797
  %v1859 = vsel %vm1858, %v1857, 2
  %vm1860 = vcmp.eq.s32.totalorder %v26, 5
  %v1861 = vsel %vm1860, %v1859, %v1850
  %vm1862 = vcmp.eq.s32.totalorder %v26, %v1857
  %v1863 = vsel %vm1862, -1.0, %v1852
  %1864 = vmax.xlane.f32.xlu0 %v1863
  %v1865 = vpop.xlane.xlu0 %1864
  %v1867 = vand.u32 %v1865, 31
  %v1868 = vsub.s32 31, %v1867
  %vm1869 = vcmp.lt.f32.partialorder 6.0, %v1797
  %v1870 = vsel %vm1869, %v1868, 2
  %vm1871 = vcmp.eq.s32.totalorder %v26, 6
  %v1872 = vsel %vm1871, %v1870, %v1861
  %vm1873 = vcmp.eq.s32.totalorder %v26, %v1868
  %v1874 = vsel %vm1873, -1.0, %v1863
  %1875 = vmax.xlane.f32.xlu0 %v1874
  %v1876 = vpop.xlane.xlu0 %1875
  %v1878 = vand.u32 %v1876, 31
  %v1879 = vsub.s32 31, %v1878
  %vm1880 = vcmp.lt.f32.partialorder 7.0, %v1797
  %v1881 = vsel %vm1880, %v1879, 2
  %vm1882 = vcmp.eq.s32.totalorder %v26, 7
  %v1883 = vsel %vm1882, %v1881, %v1872
  %1884 = vst [vmem:[%s6] sm:$0xff] %v1883
  // Predicated region
  $region22: #{img2words_forward.1} parent=0 // pred_check
    _
  $region23: #{img2words_forward.1} parent=0 // pred_check_branch
    %1886 = sbr.rel (0) target = $region25
  $region24: #{img2words_forward.1} parent=0 // pred_region
    _
  $region25: #{img2words_forward.1} parent=0 // pred_fallthru
    _
  // Predicated region
  $region26: #{img2words_forward.1} parent=0 // pred_check
    _
  $region27: #{img2words_forward.1} parent=0 // pred_check_branch
    %1888 = sbr.rel (0) target = $region29
  $region28: #{img2words_forward.1} parent=0 // pred_region
    _
  $region29: #{img2words_forward.1} parent=0 // pred_fallthru
    _
  // Predicated region
  $region30: #{img2words_forward.1} parent=0 // pred_check
    _
  $region31: #{img2words_forward.1} parent=0 // pred_check_branch
    %1890 = sbr.rel (0) target = $region33
  $region32: #{img2words_forward.1} parent=0 // pred_region
    _
  $region33: #{img2words_forward.1} parent=0 // pred_fallthru
    _
  // Predicated region
  $region34: #{img2words_forward.1} parent=0 // pred_check
    _
  $region35: #{img2words_forward.1} parent=0 // pred_check_branch
    %1892 = sbr.rel (0) target = $region37
  $region36: #{img2words_forward.1} parent=0 // pred_region
    _
  $region37: #{img2words_forward.1} parent=0 // pred_fallthru
    _

</llo_original>
